<compile_context>
chip_gen: v7x
topology: tpu7x:2x2x1
jax: 0.10.0
libtpu: 0.0.40
codegen_flags: <defaults>
</compile_context>

<pallas_src>
import functools
import math

import jax
import jax.numpy as jnp
from jax import lax
from jax.experimental import pallas as pl
from jax.experimental.pallas import tpu as pltpu


# --------------------------------------------------------------------------
# Pallas kernel: one (stage, batch) step of FFSP_Decoder.forward.
# --------------------------------------------------------------------------
def _decoder_kernel(idx_ref,                  # SMEM (B, P) int32 (scalar prefetch)
                    col_ref,                  # VMEM (M, E)
                    kt_ref,                   # VMEM (H, d, J1p)
                    v_ref,                    # VMEM (H, J1p, d)
                    shk_ref,                  # VMEM (E, J1p)
                    mask_ref,                 # VMEM (P, J1p)
                    gamma_ref, beta_ref,      # VMEM (1, E)
                    wq_ref,                   # VMEM (H, E, d)  (1/sqrt_qkv folded in)
                    wcomb_ref,                # VMEM (H*d, E)
                    bcomb_ref,                # VMEM (1, E)
                    probs_ref,                # VMEM (P, J1p)  output
                    oc_ref,                   # VMEM scratch (P, H*d)
                    *, P, M, E, H, d,
                    sqrt_embedding_dim, logit_clipping, eps):
    b = pl.program_id(1)

    # ---- gather encoded current machine: one-hot built from SMEM scalars ----
    iota_p = lax.broadcasted_iota(jnp.int32, (P, M), 0)
    iota_m = lax.broadcasted_iota(jnp.int32, (P, M), 1)
    onehot = jnp.zeros((P, M), jnp.float32)
    for p in range(P):                        # P is small & static -> unrolled
        mi = idx_ref[b, p]
        onehot = jnp.where((iota_p == p) & (iota_m == mi), 1.0, onehot)
    x = jnp.dot(onehot, col_ref[...], preferred_element_type=jnp.float32)   # (P, E)

    # ---- InstanceNorm1d over the pomo axis, per channel (affine) ----
    mean = jnp.mean(x, axis=0, keepdims=True)
    var = jnp.mean((x - mean) ** 2, axis=0, keepdims=True)
    xn = (x - mean) * lax.rsqrt(var + eps)
    xn = xn * gamma_ref[...] + beta_ref[...]                                 # (P, E)

    # ---- q projection (scale already folded into Wq), batched over heads ----
    xn_h = jnp.broadcast_to(xn[None, :, :], (H, P, E))
    q = lax.dot_general(xn_h, wq_ref[...],
                        (((2,), (1,)), ((0,), (0,))),
                        preferred_element_type=jnp.float32)                  # (H, P, d)

    # ---- batched attention: scores + single softmax over all heads ----
    s = lax.dot_general(q, kt_ref[...],
                        (((2,), (1,)), ((0,), (0,))),
                        preferred_element_type=jnp.float32)                  # (H, P, J1p)
    s = s + mask_ref[...][None, :, :]
    s = s - jnp.max(s, axis=-1, keepdims=True)
    e = jnp.exp(s)
    w = e * pl.reciprocal(jnp.sum(e, axis=-1, keepdims=True), approx=True)

    out = lax.dot_general(w, v_ref[...],
                          (((2,), (1,)), ((0,), (0,))),
                          preferred_element_type=jnp.float32)                # (H, P, d)

    # ---- concat heads into scratch, single Wcomb matmul (K = H*d) ----
    for h in range(H):
        oc_ref[:, h * d:(h + 1) * d] = out[h]
    mh = jnp.dot(oc_ref[...], wcomb_ref[...],
                 preferred_element_type=jnp.float32) + bcomb_ref[...]        # (P, E)

    # ---- single-head key score, clip, mask, softmax; lane-dense store ----
    score = jnp.dot(mh, shk_ref[...], preferred_element_type=jnp.float32)    # (P, J1p)
    score = logit_clipping * jnp.tanh(score * (1.0 / sqrt_embedding_dim))
    score = score + mask_ref[...]
    score = score - jnp.max(score, axis=-1, keepdims=True)
    e2 = jnp.exp(score)
    probs_ref[...] = e2 * pl.reciprocal(jnp.sum(e2, axis=-1, keepdims=True),
                                        approx=True)


# --------------------------------------------------------------------------
# Wrapper: all stages + all batches in ONE pallas_call.
# --------------------------------------------------------------------------
def decoder_probs_all_stages(stage_machine_idx, stacked, ninf_mask, mp):
    col = stacked['col']                      # (S, B, M, E)
    kt, v, shk = stacked['kt'], stacked['v'], stacked['shk']
    S, B, M, E = col.shape
    P = stage_machine_idx.shape[1]
    H, d = mp['head_num'], mp['qkv_dim']
    J1 = shk.shape[-1]
    J1p = ((J1 + 127) // 128) * 128           # lane-dense job axis
    pad = J1p - J1

    kt_p = jnp.pad(kt, ((0, 0),) * 4 + ((0, pad),))
    v_p = jnp.pad(v, ((0, 0),) * 3 + ((0, pad), (0, 0)))
    shk_p = jnp.pad(shk, ((0, 0),) * 3 + ((0, pad),))
    mask_p = jnp.pad(ninf_mask, ((0, 0), (0, 0), (0, pad)),
                     constant_values=-jnp.inf)

    kernel = functools.partial(
        _decoder_kernel, P=P, M=M, E=E, H=H, d=d,
        sqrt_embedding_dim=mp['sqrt_embedding_dim'],
        logit_clipping=mp['logit_clipping'], eps=1e-5)

    in_specs = [
        pl.BlockSpec((None, None, M, E), lambda s, b, idx: (s, b, 0, 0)),        # col
        pl.BlockSpec((None, None, H, d, J1p), lambda s, b, idx: (s, b, 0, 0, 0)),  # kt
        pl.BlockSpec((None, None, H, J1p, d), lambda s, b, idx: (s, b, 0, 0, 0)),  # v
        pl.BlockSpec((None, None, E, J1p), lambda s, b, idx: (s, b, 0, 0)),      # shk
        pl.BlockSpec((None, P, J1p), lambda s, b, idx: (b, 0, 0)),               # mask
        pl.BlockSpec((None, 1, E), lambda s, b, idx: (s, 0, 0)),                 # gamma
        pl.BlockSpec((None, 1, E), lambda s, b, idx: (s, 0, 0)),                 # beta
        pl.BlockSpec((None, H, E, d), lambda s, b, idx: (s, 0, 0, 0)),           # Wq
        pl.BlockSpec((None, H * d, E), lambda s, b, idx: (s, 0, 0)),             # Wcomb
        pl.BlockSpec((None, 1, E), lambda s, b, idx: (s, 0, 0)),                 # bcomb
    ]
    out_spec = pl.BlockSpec((None, None, P, J1p), lambda s, b, idx: (s, b, 0, 0))

    probs_padded = pl.pallas_call(
        kernel,
        grid_spec=pltpu.PrefetchScalarGridSpec(
            num_scalar_prefetch=1,
            grid=(S, B),
            in_specs=in_specs,
            out_specs=out_spec,
            scratch_shapes=[pltpu.VMEM((P, H * d), jnp.float32)]),
        out_shape=jax.ShapeDtypeStruct((S, B, P, J1p), jnp.float32),
        compiler_params=pltpu.CompilerParams(
            dimension_semantics=("parallel", "parallel")),
    )(stage_machine_idx.astype(jnp.int32), col, kt_p, v_p, shk_p, mask_p,
      stacked['gamma'], stacked['beta'], stacked['wq_h'],
      stacked['wcomb'], stacked['bcomb'])

    return probs_padded[..., :J1]             # (S, B, P, J1); padded cols are exactly 0


# --------------------------------------------------------------------------
# Plain-JAX glue: parameter init, set_kv precompute, stacking, reference.
# --------------------------------------------------------------------------
def reshape_by_heads(qkv, head_num):
    b, n, _ = qkv.shape
    return jnp.swapaxes(qkv.reshape(b, n, head_num, -1), 1, 2)


def init_stage_params(key, B, J, M, mp):
    E, H, d = mp['embedding_dim'], mp['head_num'], mp['qkv_dim']
    ks = jax.random.split(key, 9)
    return {
        'Wq': jax.random.normal(ks[0], (E, H * d), jnp.float32) * 0.1,
        'Wk': jax.random.normal(ks[1], (E, H * d), jnp.float32) * 0.1,
        'Wv': jax.random.normal(ks[2], (E, H * d), jnp.float32) * 0.1,
        'Wcomb': jax.random.normal(ks[3], (H * d, E), jnp.float32) * 0.1,
        'bcomb': jax.random.normal(ks[4], (1, E), jnp.float32) * 0.1,
        'encoded_NO_JOB': jax.random.uniform(ks[5], (1, 1, E), jnp.float32),
        'gamma': jnp.ones((1, E), jnp.float32),   # InstanceNorm affine defaults
        'beta': jnp.zeros((1, E), jnp.float32),
        # stand-ins for FFSP_Encoder outputs (encoder deps not provided)
        'encoded_row': jax.random.normal(ks[6], (B, J, E), jnp.float32) * 0.5,
        'encoded_col': jax.random.normal(ks[7], (B, M, E), jnp.float32) * 0.5,
    }


def set_kv(p, mp):
    H = mp['head_num']
    B, J, E = p['encoded_row'].shape
    no_job = jnp.broadcast_to(p['encoded_NO_JOB'], (B, 1, E))
    enc1 = jnp.concatenate([p['encoded_row'], no_job], axis=1)       # (B, J+1, E)
    k = reshape_by_heads(enc1 @ p['Wk'], H)                          # (B, H, J+1, d)
    v = reshape_by_heads(enc1 @ p['Wv'], H)
    kt = jnp.swapaxes(k, 2, 3)                                       # (B, H, d, J+1)
    shk = jnp.swapaxes(enc1, 1, 2)                                   # (B, E, J+1)
    return kt, v, shk


def stack_stages(stage_params, stage_kv, mp):
    """Stack per-stage params / kv on a leading stage axis for the fused kernel."""
    E, H, d = mp['embedding_dim'], mp['head_num'], mp['qkv_dim']
    wq_h = jnp.stack([
        (p['Wq'] / mp['sqrt_qkv_dim']).reshape(E, H, d).transpose(1, 0, 2)
        for p in stage_params])                                      # (S, H, E, d)
    return dict(
        col=jnp.stack([p['encoded_col'] for p in stage_params]),     # (S, B, M, E)
        gamma=jnp.stack([p['gamma'] for p in stage_params]),         # (S, 1, E)
        beta=jnp.stack([p['beta'] for p in stage_params]),
        wq_h=wq_h,
        wcomb=jnp.stack([p['Wcomb'] for p in stage_params]),         # (S, H*d, E)
        bcomb=jnp.stack([p['bcomb'] for p in stage_params]),         # (S, 1, E)
        kt=jnp.stack([kv[0] for kv in stage_kv]),                    # (S, B, H, d, J+1)
        v=jnp.stack([kv[1] for kv in stage_kv]),                     # (S, B, H, J+1, d)
        shk=jnp.stack([kv[2] for kv in stage_kv]),                   # (S, B, E, J+1)
    )


def decoder_probs_ref(stage_machine_idx, p, kt, v, shk, ninf_mask, mp):
    """Pure-JAX mirror of FFSP_Decoder.forward for correctness checking."""
    E, H = mp['embedding_dim'], mp['head_num']
    B, P = stage_machine_idx.shape
    gi = jnp.broadcast_to(stage_machine_idx[:, :, None], (B, P, E))
    x = jnp.take_along_axis(p['encoded_col'], gi, axis=1)            # (B, P, E)
    mean = jnp.mean(x, axis=1, keepdims=True)
    var = jnp.mean((x - mean) ** 2, axis=1, keepdims=True)
    xn = (x - mean) * lax.rsqrt(var + 1e-5) * p['gamma'] + p['beta']
    q = reshape_by_heads(xn @ p['Wq'], H)                            # (B, H, P, d)
    s = jnp.einsum('bhpd,bhdj->bhpj', q, kt) / mp['sqrt_qkv_dim']
    s = s + ninf_mask[:, None, :, :]
    s = s - jnp.max(s, axis=-1, keepdims=True)
    e = jnp.exp(s)
    w = e / jnp.sum(e, axis=-1, keepdims=True)
    out = jnp.einsum('bhpj,bhjd->bhpd', w, v)
    out_concat = jnp.swapaxes(out, 1, 2).reshape(B, P, -1)
    mh = out_concat @ p['Wcomb'] + p['bcomb']
    score = jnp.einsum('bpe,bej->bpj', mh, shk)
    score = mp['logit_clipping'] * jnp.tanh(score / mp['sqrt_embedding_dim'])
    score = score + ninf_mask
    score = score - jnp.max(score, axis=-1, keepdims=True)
    e = jnp.exp(score)
    return e / jnp.sum(e, axis=-1, keepdims=True)


def sch_ffsp_forward(stacked, state, mp):
    """SchFFSPModel.forward (eval / argmax branch), all stages fused in one call."""
    probs = decoder_probs_all_stages(state['stage_machine_idx'], stacked,
                                     state['job_ninf_mask'], mp)     # (S, B, P, J1)
    actions = jnp.argmax(probs, axis=-1).astype(jnp.int32)           # (S, B, P)
    action_stack = jnp.moveaxis(actions, 0, -1)                      # (B, P, S)
    prob_stack = jnp.zeros(action_stack.shape, jnp.float32)          # zeros in eval
    gi = state['stage_idx'][:, :, None]
    action = jnp.take_along_axis(action_stack, gi, axis=2)[..., 0]
    prob = jnp.take_along_axis(prob_stack, gi, axis=2)[..., 0]
    return action, prob


if __name__ == "__main__":
    # small, forward-consistent shapes
    B, P, J, M = 2, 8, 8, 4          # batch, pomo, jobs, machines ; J+1 = 9
    mp = dict(embedding_dim=32, sqrt_embedding_dim=math.sqrt(32.0),
              head_num=4, qkv_dim=8, sqrt_qkv_dim=math.sqrt(8.0),
              logit_clipping=10.0, eval_type='argmax', stage_cnt=2)

    root = jax.random.PRNGKey(0)
    k_state, *k_stages = jax.random.split(root, 1 + mp['stage_cnt'])

    stage_params = [init_stage_params(k, B, J, M, mp) for k in k_stages]
    stage_kv = [set_kv(p, mp) for p in stage_params]
    stacked = stack_stages(stage_params, stage_kv, mp)

    ks = jax.random.split(k_state, 4)
    stage_machine_idx = jax.random.randint(ks[0], (B, P), 0, M, jnp.int32)
    stage_idx = jax.random.randint(ks[1], (B, P), 0, mp['stage_cnt'], jnp.int32)
    mask_bool = jax.random.bernoulli(ks[2], 0.3, (B, P, J + 1))
    mask_bool = mask_bool.at[:, :, -1].set(False)   # NO_JOB column always available
    job_ninf_mask = jnp.where(mask_bool, -jnp.inf, 0.0).astype(jnp.float32)
    state = dict(
        BATCH_IDX=jnp.broadcast_to(jnp.arange(B)[:, None], (B, P)),
        stage_idx=stage_idx,
        stage_machine_idx=stage_machine_idx,
        job_ninf_mask=job_ninf_mask,
    )

    # correctness check of the fused Pallas decoder vs pure-JAX reference
    probs_k = decoder_probs_all_stages(stage_machine_idx, stacked,
                                       job_ninf_mask, mp)            # (S, B, P, J+1)
    for si, (p, (kt, v, shk)) in enumerate(zip(stage_params, stage_kv)):
        probs_r = decoder_probs_ref(stage_machine_idx, p, kt, v, shk,
                                    job_ninf_mask, mp)
        assert jnp.allclose(probs_k[si], probs_r, atol=3e-3, rtol=3e-3), \
            f"probs mismatch at stage {si}"

    action, prob = sch_ffsp_forward(stacked, state, mp)
    jax.block_until_ready((action, prob))
    assert action.shape == (B, P) and prob.shape == (B, P)
    print("KERNEL_OK")
</pallas_src>

<mosaic_0001>
module attributes {stable_mosaic.version = 11 : i64} {
  func.func @_decoder_kernel(%arg0: i32, %arg1: i32, %arg2: memref<2x8xi32, #tpu.memory_space<smem>>, %arg3: memref<1x1x4x32xf32, #tpu.memory_space<vmem>>, %arg4: memref<1x1x4x8x128xf32, #tpu.memory_space<vmem>>, %arg5: memref<1x1x4x128x8xf32, #tpu.memory_space<vmem>>, %arg6: memref<1x1x32x128xf32, #tpu.memory_space<vmem>>, %arg7: memref<1x8x128xf32, #tpu.memory_space<vmem>>, %arg8: memref<1x1x32xf32, #tpu.memory_space<vmem>>, %arg9: memref<1x1x32xf32, #tpu.memory_space<vmem>>, %arg10: memref<1x4x32x8xf32, #tpu.memory_space<vmem>>, %arg11: memref<1x32x32xf32, #tpu.memory_space<vmem>>, %arg12: memref<1x1x32xf32, #tpu.memory_space<vmem>>, %arg13: memref<1x1x8x128xf32, #tpu.memory_space<vmem>>, %arg14: memref<8x32xf32, #tpu.memory_space<vmem>>) attributes {dimension_semantics = [#tpu.dimension_semantics<parallel>, #tpu.dimension_semantics<parallel>], iteration_bounds = array<i64: 2, 2>, scalar_prefetch = 1 : i64, scratch_operands = 1 : i64, tpu.core_type = #tpu.core_type<tc>, window_params = [{transform_indices = @transform_0, window_bounds = array<i64: 1, 1, 4, 32>}, {transform_indices = @transform_1, window_bounds = array<i64: 1, 1, 4, 8, 128>}, {transform_indices = @transform_2, window_bounds = array<i64: 1, 1, 4, 128, 8>}, {transform_indices = @transform_3, window_bounds = array<i64: 1, 1, 32, 128>}, {transform_indices = @transform_4, window_bounds = array<i64: 1, 8, 128>}, {transform_indices = @transform_5, window_bounds = array<i64: 1, 1, 32>}, {transform_indices = @transform_6, window_bounds = array<i64: 1, 1, 32>}, {transform_indices = @transform_7, window_bounds = array<i64: 1, 4, 32, 8>}, {transform_indices = @transform_8, window_bounds = array<i64: 1, 32, 32>}, {transform_indices = @transform_9, window_bounds = array<i64: 1, 1, 32>}, {transform_indices = @transform_10, window_bounds = array<i64: 1, 1, 8, 128>}]} {
    %0 = tpu.iota {dimensions = array<i32: 0>} : vector<8x4xi32>
    %1 = tpu.iota {dimensions = array<i32: 1>} : vector<8x4xi32>
    %cst = arith.constant 0.000000e+00 : f32
    %2 = vector.broadcast %cst : f32 to vector<8x4xf32>
    %3 = arith.index_cast %arg1 : i32 to index
    %c0 = arith.constant 0 : index
    %4 = memref.load %arg2[%3, %c0] : memref<2x8xi32, #tpu.memory_space<smem>>
    %c0_i32 = arith.constant 0 : i32
    %5 = vector.broadcast %c0_i32 : i32 to vector<8x4xi32>
    %6 = arith.cmpi eq, %0, %5 : vector<8x4xi32>
    %7 = vector.broadcast %4 : i32 to vector<8x4xi32>
    %8 = arith.cmpi eq, %1, %7 : vector<8x4xi32>
    %9 = arith.andi %6, %8 : vector<8x4xi1>
    %cst_0 = arith.constant 1.000000e+00 : f32
    %10 = vector.broadcast %cst_0 : f32 to vector<8x4xf32>
    %11 = arith.select %9, %10, %2 : vector<8x4xi1>, vector<8x4xf32>
    %12 = arith.index_cast %arg1 : i32 to index
    %c1 = arith.constant 1 : index
    %13 = memref.load %arg2[%12, %c1] : memref<2x8xi32, #tpu.memory_space<smem>>
    %c1_i32 = arith.constant 1 : i32
    %14 = vector.broadcast %c1_i32 : i32 to vector<8x4xi32>
    %15 = arith.cmpi eq, %0, %14 : vector<8x4xi32>
    %16 = vector.broadcast %13 : i32 to vector<8x4xi32>
    %17 = arith.cmpi eq, %1, %16 : vector<8x4xi32>
    %18 = arith.andi %15, %17 : vector<8x4xi1>
    %cst_1 = arith.constant 1.000000e+00 : f32
    %19 = vector.broadcast %cst_1 : f32 to vector<8x4xf32>
    %20 = arith.select %18, %19, %11 : vector<8x4xi1>, vector<8x4xf32>
    %21 = arith.index_cast %arg1 : i32 to index
    %c2 = arith.constant 2 : index
    %22 = memref.load %arg2[%21, %c2] : memref<2x8xi32, #tpu.memory_space<smem>>
    %c2_i32 = arith.constant 2 : i32
    %23 = vector.broadcast %c2_i32 : i32 to vector<8x4xi32>
    %24 = arith.cmpi eq, %0, %23 : vector<8x4xi32>
    %25 = vector.broadcast %22 : i32 to vector<8x4xi32>
    %26 = arith.cmpi eq, %1, %25 : vector<8x4xi32>
    %27 = arith.andi %24, %26 : vector<8x4xi1>
    %cst_2 = arith.constant 1.000000e+00 : f32
    %28 = vector.broadcast %cst_2 : f32 to vector<8x4xf32>
    %29 = arith.select %27, %28, %20 : vector<8x4xi1>, vector<8x4xf32>
    %30 = arith.index_cast %arg1 : i32 to index
    %c3 = arith.constant 3 : index
    %31 = memref.load %arg2[%30, %c3] : memref<2x8xi32, #tpu.memory_space<smem>>
    %c3_i32 = arith.constant 3 : i32
    %32 = vector.broadcast %c3_i32 : i32 to vector<8x4xi32>
    %33 = arith.cmpi eq, %0, %32 : vector<8x4xi32>
    %34 = vector.broadcast %31 : i32 to vector<8x4xi32>
    %35 = arith.cmpi eq, %1, %34 : vector<8x4xi32>
    %36 = arith.andi %33, %35 : vector<8x4xi1>
    %cst_3 = arith.constant 1.000000e+00 : f32
    %37 = vector.broadcast %cst_3 : f32 to vector<8x4xf32>
    %38 = arith.select %36, %37, %29 : vector<8x4xi1>, vector<8x4xf32>
    %39 = arith.index_cast %arg1 : i32 to index
    %c4 = arith.constant 4 : index
    %40 = memref.load %arg2[%39, %c4] : memref<2x8xi32, #tpu.memory_space<smem>>
    %c4_i32 = arith.constant 4 : i32
    %41 = vector.broadcast %c4_i32 : i32 to vector<8x4xi32>
    %42 = arith.cmpi eq, %0, %41 : vector<8x4xi32>
    %43 = vector.broadcast %40 : i32 to vector<8x4xi32>
    %44 = arith.cmpi eq, %1, %43 : vector<8x4xi32>
    %45 = arith.andi %42, %44 : vector<8x4xi1>
    %cst_4 = arith.constant 1.000000e+00 : f32
    %46 = vector.broadcast %cst_4 : f32 to vector<8x4xf32>
    %47 = arith.select %45, %46, %38 : vector<8x4xi1>, vector<8x4xf32>
    %48 = arith.index_cast %arg1 : i32 to index
    %c5 = arith.constant 5 : index
    %49 = memref.load %arg2[%48, %c5] : memref<2x8xi32, #tpu.memory_space<smem>>
    %c5_i32 = arith.constant 5 : i32
    %50 = vector.broadcast %c5_i32 : i32 to vector<8x4xi32>
    %51 = arith.cmpi eq, %0, %50 : vector<8x4xi32>
    %52 = vector.broadcast %49 : i32 to vector<8x4xi32>
    %53 = arith.cmpi eq, %1, %52 : vector<8x4xi32>
    %54 = arith.andi %51, %53 : vector<8x4xi1>
    %cst_5 = arith.constant 1.000000e+00 : f32
    %55 = vector.broadcast %cst_5 : f32 to vector<8x4xf32>
    %56 = arith.select %54, %55, %47 : vector<8x4xi1>, vector<8x4xf32>
    %57 = arith.index_cast %arg1 : i32 to index
    %c6 = arith.constant 6 : index
    %58 = memref.load %arg2[%57, %c6] : memref<2x8xi32, #tpu.memory_space<smem>>
    %c6_i32 = arith.constant 6 : i32
    %59 = vector.broadcast %c6_i32 : i32 to vector<8x4xi32>
    %60 = arith.cmpi eq, %0, %59 : vector<8x4xi32>
    %61 = vector.broadcast %58 : i32 to vector<8x4xi32>
    %62 = arith.cmpi eq, %1, %61 : vector<8x4xi32>
    %63 = arith.andi %60, %62 : vector<8x4xi1>
    %cst_6 = arith.constant 1.000000e+00 : f32
    %64 = vector.broadcast %cst_6 : f32 to vector<8x4xf32>
    %65 = arith.select %63, %64, %56 : vector<8x4xi1>, vector<8x4xf32>
    %66 = arith.index_cast %arg1 : i32 to index
    %c7 = arith.constant 7 : index
    %67 = memref.load %arg2[%66, %c7] : memref<2x8xi32, #tpu.memory_space<smem>>
    %c7_i32 = arith.constant 7 : i32
    %68 = vector.broadcast %c7_i32 : i32 to vector<8x4xi32>
    %69 = arith.cmpi eq, %0, %68 : vector<8x4xi32>
    %70 = vector.broadcast %67 : i32 to vector<8x4xi32>
    %71 = arith.cmpi eq, %1, %70 : vector<8x4xi32>
    %72 = arith.andi %69, %71 : vector<8x4xi1>
    %cst_7 = arith.constant 1.000000e+00 : f32
    %73 = vector.broadcast %cst_7 : f32 to vector<8x4xf32>
    %74 = arith.select %72, %73, %65 : vector<8x4xi1>, vector<8x4xf32>
    %c0_8 = arith.constant 0 : index
    %c0_9 = arith.constant 0 : index
    %c0_10 = arith.constant 0 : index
    %c0_11 = arith.constant 0 : index
    %75 = vector.load %arg3[%c0_8, %c0_9, %c0_10, %c0_11] : memref<1x1x4x32xf32, #tpu.memory_space<vmem>>, vector<1x1x4x32xf32>
    %76 = vector.shape_cast %75 : vector<1x1x4x32xf32> to vector<4x32xf32>
    %cst_12 = arith.constant dense<0.000000e+00> : vector<8x32xf32>
    %77 = tpu.matmul %74, %76, %cst_12 {dimension_numbers = #tpu.dot_dimension_numbers<[1], [0], [0], [1], [0, 0, 1, 1], [], []>} : vector<8x4xf32>, vector<4x32xf32>, vector<8x32xf32> -> vector<8x32xf32>
    %cst_13 = arith.constant dense<0.000000e+00> : vector<32xf32>
    %78 = vector.multi_reduction <add>, %77, %cst_13 [0] : vector<8x32xf32> to vector<32xf32>
    %79 = vector.shape_cast %78 : vector<32xf32> to vector<1x32xf32>
    %cst_14 = arith.constant 8.000000e+00 : f32
    %80 = vector.broadcast %cst_14 : f32 to vector<1x32xf32>
    %81 = arith.divf %79, %80 : vector<1x32xf32>
    %82 = vector.broadcast %81 : vector<1x32xf32> to vector<8x32xf32>
    %83 = arith.subf %77, %82 : vector<8x32xf32>
    %84 = arith.mulf %83, %83 : vector<8x32xf32>
    %cst_15 = arith.constant dense<0.000000e+00> : vector<32xf32>
    %85 = vector.multi_reduction <add>, %84, %cst_15 [0] : vector<8x32xf32> to vector<32xf32>
    %86 = vector.shape_cast %85 : vector<32xf32> to vector<1x32xf32>
    %cst_16 = arith.constant 8.000000e+00 : f32
    %87 = vector.broadcast %cst_16 : f32 to vector<1x32xf32>
    %88 = arith.divf %86, %87 : vector<1x32xf32>
    %89 = vector.broadcast %81 : vector<1x32xf32> to vector<8x32xf32>
    %90 = arith.subf %77, %89 : vector<8x32xf32>
    %cst_17 = arith.constant 9.99999974E-6 : f32
    %91 = vector.broadcast %cst_17 : f32 to vector<1x32xf32>
    %92 = arith.addf %88, %91 : vector<1x32xf32>
    %93 = math.rsqrt %92 : vector<1x32xf32>
    %94 = vector.broadcast %93 : vector<1x32xf32> to vector<8x32xf32>
    %95 = arith.mulf %90, %94 : vector<8x32xf32>
    %c0_18 = arith.constant 0 : index
    %c0_19 = arith.constant 0 : index
    %c0_20 = arith.constant 0 : index
    %96 = vector.load %arg8[%c0_18, %c0_19, %c0_20] : memref<1x1x32xf32, #tpu.memory_space<vmem>>, vector<1x1x32xf32>
    %97 = vector.shape_cast %96 : vector<1x1x32xf32> to vector<1x32xf32>
    %98 = vector.broadcast %97 : vector<1x32xf32> to vector<8x32xf32>
    %99 = arith.mulf %95, %98 : vector<8x32xf32>
    %c0_21 = arith.constant 0 : index
    %c0_22 = arith.constant 0 : index
    %c0_23 = arith.constant 0 : index
    %100 = vector.load %arg9[%c0_21, %c0_22, %c0_23] : memref<1x1x32xf32, #tpu.memory_space<vmem>>, vector<1x1x32xf32>
    %101 = vector.shape_cast %100 : vector<1x1x32xf32> to vector<1x32xf32>
    %102 = vector.broadcast %101 : vector<1x32xf32> to vector<8x32xf32>
    %103 = arith.addf %99, %102 : vector<8x32xf32>
    %104 = vector.shape_cast %103 : vector<8x32xf32> to vector<1x8x32xf32>
    %105 = vector.shape_cast %104 : vector<1x8x32xf32> to vector<1x8x32xf32>
    %106 = vector.broadcast %105 : vector<1x8x32xf32> to vector<4x8x32xf32>
    %c0_24 = arith.constant 0 : index
    %c0_25 = arith.constant 0 : index
    %c0_26 = arith.constant 0 : index
    %c0_27 = arith.constant 0 : index
    %107 = vector.load %arg10[%c0_24, %c0_25, %c0_26, %c0_27] : memref<1x4x32x8xf32, #tpu.memory_space<vmem>>, vector<1x4x32x8xf32>
    %108 = vector.shape_cast %107 : vector<1x4x32x8xf32> to vector<4x32x8xf32>
    %cst_28 = arith.constant dense<0.000000e+00> : vector<4x8x8xf32>
    %109 = tpu.matmul %106, %108, %cst_28 {dimension_numbers = #tpu.dot_dimension_numbers<[2], [1], [1], [2], [0, 0, 0, 1, 1, 2], [0], [0]>} : vector<4x8x32xf32>, vector<4x32x8xf32>, vector<4x8x8xf32> -> vector<4x8x8xf32>
    %c0_29 = arith.constant 0 : index
    %c0_30 = arith.constant 0 : index
    %c0_31 = arith.constant 0 : index
    %c0_32 = arith.constant 0 : index
    %c0_33 = arith.constant 0 : index
    %110 = vector.load %arg4[%c0_29, %c0_30, %c0_31, %c0_32, %c0_33] : memref<1x1x4x8x128xf32, #tpu.memory_space<vmem>>, vector<1x1x4x8x128xf32>
    %111 = vector.shape_cast %110 : vector<1x1x4x8x128xf32> to vector<4x8x128xf32>
    %cst_34 = arith.constant dense<0.000000e+00> : vector<4x8x128xf32>
    %112 = tpu.matmul %109, %111, %cst_34 {dimension_numbers = #tpu.dot_dimension_numbers<[2], [1], [1], [2], [0, 0, 0, 1, 1, 2], [0], [0]>} : vector<4x8x8xf32>, vector<4x8x128xf32>, vector<4x8x128xf32> -> vector<4x8x128xf32>
    %c0_35 = arith.constant 0 : index
    %c0_36 = arith.constant 0 : index
    %c0_37 = arith.constant 0 : index
    %113 = vector.load %arg7[%c0_35, %c0_36, %c0_37] : memref<1x8x128xf32, #tpu.memory_space<vmem>>, vector<1x8x128xf32>
    %114 = vector.shape_cast %113 : vector<1x8x128xf32> to vector<8x128xf32>
    %115 = vector.shape_cast %114 : vector<8x128xf32> to vector<1x8x128xf32>
    %116 = vector.broadcast %115 : vector<1x8x128xf32> to vector<4x8x128xf32>
    %117 = arith.addf %112, %116 : vector<4x8x128xf32>
    %cst_38 = arith.constant dense<0xFF800000> : vector<4x8xf32>
    %118 = vector.multi_reduction <maximumf>, %117, %cst_38 [2] : vector<4x8x128xf32> to vector<4x8xf32>
    %119 = vector.shape_cast %118 : vector<4x8xf32> to vector<4x8x1xf32>
    %120 = vector.broadcast %119 : vector<4x8x1xf32> to vector<4x8x128xf32>
    %121 = arith.subf %117, %120 : vector<4x8x128xf32>
    %122 = math.exp %121 : vector<4x8x128xf32>
    %cst_39 = arith.constant dense<0.000000e+00> : vector<4x8xf32>
    %123 = vector.multi_reduction <add>, %122, %cst_39 [2] : vector<4x8x128xf32> to vector<4x8xf32>
    %124 = vector.shape_cast %123 : vector<4x8xf32> to vector<4x8x1xf32>
    %125 = tpu.reciprocal %124 {approx = true} : vector<4x8x1xf32> -> vector<4x8x1xf32>
    %126 = vector.broadcast %125 : vector<4x8x1xf32> to vector<4x8x128xf32>
    %127 = arith.mulf %122, %126 : vector<4x8x128xf32>
    %c0_40 = arith.constant 0 : index
    %c0_41 = arith.constant 0 : index
    %c0_42 = arith.constant 0 : index
    %c0_43 = arith.constant 0 : index
    %c0_44 = arith.constant 0 : index
    %128 = vector.load %arg5[%c0_40, %c0_41, %c0_42, %c0_43, %c0_44] : memref<1x1x4x128x8xf32, #tpu.memory_space<vmem>>, vector<1x1x4x128x8xf32>
    %129 = vector.shape_cast %128 : vector<1x1x4x128x8xf32> to vector<4x128x8xf32>
    %cst_45 = arith.constant dense<0.000000e+00> : vector<4x8x8xf32>
    %130 = tpu.matmul %127, %129, %cst_45 {dimension_numbers = #tpu.dot_dimension_numbers<[2], [1], [1], [2], [0, 0, 0, 1, 1, 2], [0], [0]>} : vector<4x8x128xf32>, vector<4x128x8xf32>, vector<4x8x8xf32> -> vector<4x8x8xf32>
    %131 = vector.extract_strided_slice %130 {offsets = [0, 0, 0], sizes = [1, 8, 8], strides = [1, 1, 1]} : vector<4x8x8xf32> to vector<1x8x8xf32>
    %132 = vector.shape_cast %131 : vector<1x8x8xf32> to vector<8x8xf32>
    %c0_46 = arith.constant 0 : index
    %c0_47 = arith.constant 0 : index
    %133 = vector.load %arg14[%c0_46, %c0_47] : memref<8x32xf32, #tpu.memory_space<vmem>>, vector<8x8xf32>
    tpu.vector_store %arg14[%c0_46, %c0_47], %132 {strides = array<i32>} : memref<8x32xf32, #tpu.memory_space<vmem>>, vector<8x8xf32>,
    %134 = vector.extract_strided_slice %130 {offsets = [1, 0, 0], sizes = [1, 8, 8], strides = [1, 1, 1]} : vector<4x8x8xf32> to vector<1x8x8xf32>
    %135 = vector.shape_cast %134 : vector<1x8x8xf32> to vector<8x8xf32>
    %c0_48 = arith.constant 0 : index
    %c8 = arith.constant 8 : index
    %136 = vector.load %arg14[%c0_48, %c8] : memref<8x32xf32, #tpu.memory_space<vmem>>, vector<8x8xf32>
    tpu.vector_store %arg14[%c0_48, %c8], %135 {strides = array<i32>} : memref<8x32xf32, #tpu.memory_space<vmem>>, vector<8x8xf32>,
    %137 = vector.extract_strided_slice %130 {offsets = [2, 0, 0], sizes = [1, 8, 8], strides = [1, 1, 1]} : vector<4x8x8xf32> to vector<1x8x8xf32>
    %138 = vector.shape_cast %137 : vector<1x8x8xf32> to vector<8x8xf32>
    %c0_49 = arith.constant 0 : index
    %c16 = arith.constant 16 : index
    %139 = vector.load %arg14[%c0_49, %c16] : memref<8x32xf32, #tpu.memory_space<vmem>>, vector<8x8xf32>
    tpu.vector_store %arg14[%c0_49, %c16], %138 {strides = array<i32>} : memref<8x32xf32, #tpu.memory_space<vmem>>, vector<8x8xf32>,
    %140 = vector.extract_strided_slice %130 {offsets = [3, 0, 0], sizes = [1, 8, 8], strides = [1, 1, 1]} : vector<4x8x8xf32> to vector<1x8x8xf32>
    %141 = vector.shape_cast %140 : vector<1x8x8xf32> to vector<8x8xf32>
    %c0_50 = arith.constant 0 : index
    %c24 = arith.constant 24 : index
    %142 = vector.load %arg14[%c0_50, %c24] : memref<8x32xf32, #tpu.memory_space<vmem>>, vector<8x8xf32>
    tpu.vector_store %arg14[%c0_50, %c24], %141 {strides = array<i32>} : memref<8x32xf32, #tpu.memory_space<vmem>>, vector<8x8xf32>,
    %c0_51 = arith.constant 0 : index
    %c0_52 = arith.constant 0 : index
    %143 = vector.load %arg14[%c0_51, %c0_52] : memref<8x32xf32, #tpu.memory_space<vmem>>, vector<8x32xf32>
    %c0_53 = arith.constant 0 : index
    %c0_54 = arith.constant 0 : index
    %c0_55 = arith.constant 0 : index
    %144 = vector.load %arg11[%c0_53, %c0_54, %c0_55] : memref<1x32x32xf32, #tpu.memory_space<vmem>>, vector<1x32x32xf32>
    %145 = vector.shape_cast %144 : vector<1x32x32xf32> to vector<32x32xf32>
    %cst_56 = arith.constant dense<0.000000e+00> : vector<8x32xf32>
    %146 = tpu.matmul %143, %145, %cst_56 {dimension_numbers = #tpu.dot_dimension_numbers<[1], [0], [0], [1], [0, 0, 1, 1], [], []>} : vector<8x32xf32>, vector<32x32xf32>, vector<8x32xf32> -> vector<8x32xf32>
    %c0_57 = arith.constant 0 : index
    %c0_58 = arith.constant 0 : index
    %c0_59 = arith.constant 0 : index
    %147 = vector.load %arg12[%c0_57, %c0_58, %c0_59] : memref<1x1x32xf32, #tpu.memory_space<vmem>>, vector<1x1x32xf32>
    %148 = vector.shape_cast %147 : vector<1x1x32xf32> to vector<1x32xf32>
    %149 = vector.broadcast %148 : vector<1x32xf32> to vector<8x32xf32>
    %150 = arith.addf %146, %149 : vector<8x32xf32>
    %c0_60 = arith.constant 0 : index
    %c0_61 = arith.constant 0 : index
    %c0_62 = arith.constant 0 : index
    %c0_63 = arith.constant 0 : index
    %151 = vector.load %arg6[%c0_60, %c0_61, %c0_62, %c0_63] : memref<1x1x32x128xf32, #tpu.memory_space<vmem>>, vector<1x1x32x128xf32>
    %152 = vector.shape_cast %151 : vector<1x1x32x128xf32> to vector<32x128xf32>
    %cst_64 = arith.constant dense<0.000000e+00> : vector<8x128xf32>
    %153 = tpu.matmul %150, %152, %cst_64 {dimension_numbers = #tpu.dot_dimension_numbers<[1], [0], [0], [1], [0, 0, 1, 1], [], []>} : vector<8x32xf32>, vector<32x128xf32>, vector<8x128xf32> -> vector<8x128xf32>
    %cst_65 = arith.constant 0.176776692 : f32
    %154 = vector.broadcast %cst_65 : f32 to vector<8x128xf32>
    %155 = arith.mulf %153, %154 : vector<8x128xf32>
    %156 = math.tanh %155 : vector<8x128xf32>
    %cst_66 = arith.constant 1.000000e+01 : f32
    %157 = vector.broadcast %cst_66 : f32 to vector<8x128xf32>
    %158 = arith.mulf %157, %156 : vector<8x128xf32>
    %c0_67 = arith.constant 0 : index
    %c0_68 = arith.constant 0 : index
    %c0_69 = arith.constant 0 : index
    %159 = vector.load %arg7[%c0_67, %c0_68, %c0_69] : memref<1x8x128xf32, #tpu.memory_space<vmem>>, vector<1x8x128xf32>
    %160 = vector.shape_cast %159 : vector<1x8x128xf32> to vector<8x128xf32>
    %161 = arith.addf %158, %160 : vector<8x128xf32>
    %cst_70 = arith.constant dense<0xFF800000> : vector<8xf32>
    %162 = vector.multi_reduction <maximumf>, %161, %cst_70 [1] : vector<8x128xf32> to vector<8xf32>
    %163 = vector.shape_cast %162 : vector<8xf32> to vector<8x1xf32>
    %164 = vector.broadcast %163 : vector<8x1xf32> to vector<8x128xf32>
    %165 = arith.subf %161, %164 : vector<8x128xf32>
    %166 = math.exp %165 : vector<8x128xf32>
    %cst_71 = arith.constant dense<0.000000e+00> : vector<8xf32>
    %167 = vector.multi_reduction <add>, %166, %cst_71 [1] : vector<8x128xf32> to vector<8xf32>
    %168 = vector.shape_cast %167 : vector<8xf32> to vector<8x1xf32>
    %169 = tpu.reciprocal %168 {approx = true} : vector<8x1xf32> -> vector<8x1xf32>
    %170 = vector.broadcast %169 : vector<8x1xf32> to vector<8x128xf32>
    %171 = arith.mulf %166, %170 : vector<8x128xf32>
    %c0_72 = arith.constant 0 : index
    %c0_73 = arith.constant 0 : index
    %c0_74 = arith.constant 0 : index
    %c0_75 = arith.constant 0 : index
    %172 = vector.load %arg13[%c0_72, %c0_73, %c0_74, %c0_75] : memref<1x1x8x128xf32, #tpu.memory_space<vmem>>, vector<1x1x8x128xf32>
    %173 = vector.shape_cast %172 : vector<1x1x8x128xf32> to vector<8x128xf32>
    %174 = vector.shape_cast %171 : vector<8x128xf32> to vector<1x1x8x128xf32>
    tpu.vector_store %arg13[%c0_72, %c0_73, %c0_74, %c0_75], %174 {strides = array<i32>} : memref<1x1x8x128xf32, #tpu.memory_space<vmem>>, vector<1x1x8x128xf32>,
    return
  }
  func.func @transform_0(%arg0: i32, %arg1: i32, %arg2: memref<2x8xi32, #tpu.memory_space<smem>>) -> (i32, i32, i32, i32) {
    %c0_i32 = arith.constant 0 : i32
    %c0_i32_0 = arith.constant 0 : i32
    %c0_i32_1 = arith.constant 0 : i32
    return %arg0, %arg1, %c0_i32, %c0_i32_0 : i32, i32, i32, i32
  }
  func.func @transform_1(%arg0: i32, %arg1: i32, %arg2: memref<2x8xi32, #tpu.memory_space<smem>>) -> (i32, i32, i32, i32, i32) {
    %c0_i32 = arith.constant 0 : i32
    %c0_i32_0 = arith.constant 0 : i32
    %c0_i32_1 = arith.constant 0 : i32
    %c0_i32_2 = arith.constant 0 : i32
    return %arg0, %arg1, %c0_i32, %c0_i32_0, %c0_i32_1 : i32, i32, i32, i32, i32
  }
  func.func @transform_2(%arg0: i32, %arg1: i32, %arg2: memref<2x8xi32, #tpu.memory_space<smem>>) -> (i32, i32, i32, i32, i32) {
    %c0_i32 = arith.constant 0 : i32
    %c0_i32_0 = arith.constant 0 : i32
    %c0_i32_1 = arith.constant 0 : i32
    %c0_i32_2 = arith.constant 0 : i32
    return %arg0, %arg1, %c0_i32, %c0_i32_0, %c0_i32_1 : i32, i32, i32, i32, i32
  }
  func.func @transform_3(%arg0: i32, %arg1: i32, %arg2: memref<2x8xi32, #tpu.memory_space<smem>>) -> (i32, i32, i32, i32) {
    %c0_i32 = arith.constant 0 : i32
    %c0_i32_0 = arith.constant 0 : i32
    %c0_i32_1 = arith.constant 0 : i32
    return %arg0, %arg1, %c0_i32, %c0_i32_0 : i32, i32, i32, i32
  }
  func.func @transform_4(%arg0: i32, %arg1: i32, %arg2: memref<2x8xi32, #tpu.memory_space<smem>>) -> (i32, i32, i32) {
    %c0_i32 = arith.constant 0 : i32
    %c0_i32_0 = arith.constant 0 : i32
    %c0_i32_1 = arith.constant 0 : i32
    return %arg1, %c0_i32, %c0_i32_0 : i32, i32, i32
  }
  func.func @transform_5(%arg0: i32, %arg1: i32, %arg2: memref<2x8xi32, #tpu.memory_space<smem>>) -> (i32, i32, i32) {
    %c0_i32 = arith.constant 0 : i32
    %c0_i32_0 = arith.constant 0 : i32
    %c0_i32_1 = arith.constant 0 : i32
    return %arg0, %c0_i32, %c0_i32_0 : i32, i32, i32
  }
  func.func @transform_6(%arg0: i32, %arg1: i32, %arg2: memref<2x8xi32, #tpu.memory_space<smem>>) -> (i32, i32, i32) {
    %c0_i32 = arith.constant 0 : i32
    %c0_i32_0 = arith.constant 0 : i32
    %c0_i32_1 = arith.constant 0 : i32
    return %arg0, %c0_i32, %c0_i32_0 : i32, i32, i32
  }
  func.func @transform_7(%arg0: i32, %arg1: i32, %arg2: memref<2x8xi32, #tpu.memory_space<smem>>) -> (i32, i32, i32, i32) {
    %c0_i32 = arith.constant 0 : i32
    %c0_i32_0 = arith.constant 0 : i32
    %c0_i32_1 = arith.constant 0 : i32
    %c0_i32_2 = arith.constant 0 : i32
    return %arg0, %c0_i32, %c0_i32_0, %c0_i32_1 : i32, i32, i32, i32
  }
  func.func @transform_8(%arg0: i32, %arg1: i32, %arg2: memref<2x8xi32, #tpu.memory_space<smem>>) -> (i32, i32, i32) {
    %c0_i32 = arith.constant 0 : i32
    %c0_i32_0 = arith.constant 0 : i32
    %c0_i32_1 = arith.constant 0 : i32
    return %arg0, %c0_i32, %c0_i32_0 : i32, i32, i32
  }
  func.func @transform_9(%arg0: i32, %arg1: i32, %arg2: memref<2x8xi32, #tpu.memory_space<smem>>) -> (i32, i32, i32) {
    %c0_i32 = arith.constant 0 : i32
    %c0_i32_0 = arith.constant 0 : i32
    %c0_i32_1 = arith.constant 0 : i32
    return %arg0, %c0_i32, %c0_i32_0 : i32, i32, i32
  }
  func.func @transform_10(%arg0: i32, %arg1: i32, %arg2: memref<2x8xi32, #tpu.memory_space<smem>>) -> (i32, i32, i32, i32) {
    %c0_i32 = arith.constant 0 : i32
    %c0_i32_0 = arith.constant 0 : i32
    %c0_i32_1 = arith.constant 0 : i32
    return %arg0, %arg1, %c0_i32, %c0_i32_0 : i32, i32, i32, i32
  }
}

</mosaic_0001>

<llo_original>
// kernel: tpu_custom_call.1
$region0: #{tpu_custom_call.1}
  #allocation0 [shape = 'u32[]', space=smem, size = 0x4, offset = 0x4, fixed_abs, tag = 'smem constant byte address 0x4 - core index']
  #allocation1 [shape = 'u32[144,128]{1,0:T(1,128)}', space=vmem, size = 0x12000, scoped, tag = 'internal scratch']
  #allocation2 [shape = 'f32[8,32]{1,0:T(8,128)}', space=vmem, size = 0x1000, scoped, tag = 'scratch operand']
  #allocation3 [shape = 's32[1]{0}', space=sflag, size = 0x4, scoped, tag = 'scoped memory for tpu_custom_call.1']
  #allocation4 [shape = 'u8[1024]{0}', space=smem, size = 0x400, scoped, tag = 'prefetched SMEM operand 0']
  %s0 = inlined_call_operand.vmem [shape: s32[2,8], index: 0, kind: input, shape index: {}]
  %s1 = inlined_call_operand.vmem [shape: f32[2,2,4,32], index: 1, kind: input, shape index: {}]
  %s2 = inlined_call_operand.vmem [shape: f32[2,2,4,8,128], index: 2, kind: input, shape index: {}]
  %s3 = inlined_call_operand.vmem [shape: f32[2,2,4,128,8], index: 3, kind: input, shape index: {}]
  %s4 = inlined_call_operand.vmem [shape: f32[2,2,32,128], index: 4, kind: input, shape index: {}]
  %s5 = inlined_call_operand.vmem [shape: f32[2,8,128], index: 5, kind: input, shape index: {}]
  %s6 = inlined_call_operand.vmem [shape: f32[2,1,32], index: 6, kind: input, shape index: {}]
  %s7 = inlined_call_operand.vmem [shape: f32[2,1,32], index: 7, kind: input, shape index: {}]
  %s8 = inlined_call_operand.vmem [shape: f32[2,4,32,8], index: 8, kind: input, shape index: {}]
  %s9 = inlined_call_operand.vmem [shape: f32[2,32,32], index: 9, kind: input, shape index: {}]
  %s10 = inlined_call_operand.vmem [shape: f32[2,1,32], index: 10, kind: input, shape index: {}]
  %s11 = inlined_call_operand.hbm [shape: f32[2,2,8,128], index: 11, kind: output, shape index: {}]
  %s12 = sld [smem:[#allocation0]]
  $region73: #{tpu_custom_call.1} parent=0
    _
  %s14 = ssub.s32 1, %s12
  %s15 = scalar_select 0, %s14, %s12
  %s16 = sshll.u32 %s0, 4
  %s17 = int_to_ptr.vmem [resolvable:$true] %s16
  %19 = dma.vmem_to_smem %s17, 32, [#allocation4], [#allocation3]
  %20 = dma.done [#allocation3], 32
  %21 = sfence
  $region1: #{tpu_custom_call.1} parent=0
    #allocation5 [shape = 'u8[8192]{0}', space=vmem, size = 0x2000, scoped, tag = 'output window, operand 0']
    #allocation6 [shape = 's32[2]{0}', space=sflag, size = 0x8, scoped, tag = 'scoped memory for tpu_custom_call.1']
    %22 = vsyncpa [#allocation6], 0
    %s23 = scalar_lea.sflag [#allocation6], 1
    %24 = vsyncpa %s23, 0
    loop: start=0, step=1, limit=6
    $region2: #{tpu_custom_call.1} parent=1 // loop_pre_header
      _
    $region3: #{tpu_custom_call.1} parent=1 // loop_header
      %s26 = sphi 0, %s30
      %p27 = scmp.ge.s32.totalorder %s26, 6
      %s33 = sphi 0, %s45
      %s34 = sphi 0, %s41
      %s35 = sphi 0, %s33
      %s36 = sphi 0, %s34
      %s37 = sphi 0, %s35
      %s38 = sphi 0, %s36
      %s50 = sphi 0, %s52
      %s53 = sphi 0, %s50
      %s54 = sphi 0, %s53
      %s70 = sphi 0, %s54
      %s78 = sphi 0, %s80
      %s81 = sphi 0, %s78
      %s82 = sphi 0, %s81
      %s98 = sphi 0, %s82
      %s106 = sphi 0, %s108
      %s109 = sphi 0, %s106
      %s110 = sphi 0, %s109
      %s126 = sphi 0, %s110
      %s134 = sphi 0, %s136
      %s137 = sphi 0, %s134
      %s138 = sphi 0, %s137
      %s154 = sphi 0, %s138
      %s160 = sphi 0, %s162
      %s163 = sphi 0, %s160
      %s164 = sphi 0, %s163
      %s180 = sphi 0, %s164
      %s186 = sphi 0, %s188
      %s189 = sphi 0, %s186
      %s190 = sphi 0, %s189
      %s206 = sphi 0, %s190
      %s212 = sphi 0, %s214
      %s215 = sphi 0, %s212
      %s216 = sphi 0, %s215
      %s232 = sphi 0, %s216
      %s238 = sphi 0, %s240
      %s241 = sphi 0, %s238
      %s242 = sphi 0, %s241
      %s258 = sphi 0, %s242
      %s264 = sphi 0, %s266
      %s267 = sphi 0, %s264
      %s268 = sphi 0, %s267
      %s284 = sphi 0, %s268
      %s290 = sphi 0, %s292
      %s293 = sphi 0, %s290
      %s294 = sphi 0, %s293
      %s310 = sphi 0, %s294
      %s318 = sphi 0, %s320
      %s321 = sphi 0, %s318
      %s322 = sphi 0, %s321
      %s338 = sphi 0, %s322
    $region4: #{tpu_custom_call.1} parent=1 // loop_header_branch
      %29 = sbr.rel (%p27) target = $region8
    $region5: #{tpu_custom_call.1} parent=1 // loop_body
      %s31 = ssub.s32 %s26, 1
      %s32 = ssub.s32 %s26, 2
      %s39 = sadd.s32 1, %s34
      %p40 = scmp.ge.s32.totalorder %s39, 2
      %s41 = scalar_select %p40, 0, %s39
      %s42 = sadd.s32 1, %s33
      %s43 = scalar_select %p40, %s42, %s33
      %p44 = scmp.ge.s32.totalorder %s43, 2
      %s45 = scalar_select %p44, 0, %s43
      %s46 = ssub.s32 %s33, %s45
      %s47 = ssub.s32 %s34, %s41
      %s48 = sor.u32 %s46, %s47
      %p49 = scmp.eq.s32.totalorder %s48, 0
      %s51 = sadd.s32 %s50, 1
      %s52 = scalar_select %p49, %s50, %s51
      %p55 = pneg %p49
      %p56 = scmp.eq.s32.totalorder %s26, 3
      %p57 = por %p55, %p56
      %p58 = scmp.ne.s32.totalorder %s50, %s53
      %p59 = scmp.eq.s32.totalorder %s26, 0
      %p60 = por %p58, %p59
      %p61 = scmp.ne.s32.totalorder %s50, %s53
      %p62 = scmp.eq.s32.totalorder %s31, 3
      %p63 = por %p61, %p62
      %p64 = scmp.ne.s32.totalorder %s53, %s54
      %p65 = scmp.eq.s32.totalorder %s31, 0
      %p66 = por %p64, %p65
      %p67 = scmp.ne.s32.totalorder %s53, %s54
      %p68 = scmp.eq.s32.totalorder %s32, 3
      %p69 = por %p67, %p68
      %p71 = scmp.ne.s32.totalorder %s54, %s70
      %p72 = scmp.eq.s32.totalorder %s32, 0
      %p73 = por %p71, %p72
      %s74 = ssub.s32 %s33, %s45
      %s75 = ssub.s32 %s34, %s41
      %s76 = sor.u32 %s74, %s75
      %p77 = scmp.eq.s32.totalorder %s76, 0
      %s79 = sadd.s32 %s78, 1
      %s80 = scalar_select %p77, %s78, %s79
      %p83 = pneg %p77
      %p84 = scmp.eq.s32.totalorder %s26, 3
      %p85 = por %p83, %p84
      %p86 = scmp.ne.s32.totalorder %s78, %s81
      %p87 = scmp.eq.s32.totalorder %s26, 0
      %p88 = por %p86, %p87
      %p89 = scmp.ne.s32.totalorder %s78, %s81
      %p90 = scmp.eq.s32.totalorder %s31, 3
      %p91 = por %p89, %p90
      %p92 = scmp.ne.s32.totalorder %s81, %s82
      %p93 = scmp.eq.s32.totalorder %s31, 0
      %p94 = por %p92, %p93
      %p95 = scmp.ne.s32.totalorder %s81, %s82
      %p96 = scmp.eq.s32.totalorder %s32, 3
      %p97 = por %p95, %p96
      %p99 = scmp.ne.s32.totalorder %s82, %s98
      %p100 = scmp.eq.s32.totalorder %s32, 0
      %p101 = por %p99, %p100
      %s102 = ssub.s32 %s33, %s45
      %s103 = ssub.s32 %s34, %s41
      %s104 = sor.u32 %s102, %s103
      %p105 = scmp.eq.s32.totalorder %s104, 0
      %s107 = sadd.s32 %s106, 1
      %s108 = scalar_select %p105, %s106, %s107
      %p111 = pneg %p105
      %p112 = scmp.eq.s32.totalorder %s26, 3
      %p113 = por %p111, %p112
      %p114 = scmp.ne.s32.totalorder %s106, %s109
      %p115 = scmp.eq.s32.totalorder %s26, 0
      %p116 = por %p114, %p115
      %p117 = scmp.ne.s32.totalorder %s106, %s109
      %p118 = scmp.eq.s32.totalorder %s31, 3
      %p119 = por %p117, %p118
      %p120 = scmp.ne.s32.totalorder %s109, %s110
      %p121 = scmp.eq.s32.totalorder %s31, 0
      %p122 = por %p120, %p121
      %p123 = scmp.ne.s32.totalorder %s109, %s110
      %p124 = scmp.eq.s32.totalorder %s32, 3
      %p125 = por %p123, %p124
      %p127 = scmp.ne.s32.totalorder %s110, %s126
      %p128 = scmp.eq.s32.totalorder %s32, 0
      %p129 = por %p127, %p128
      %s130 = ssub.s32 %s33, %s45
      %s131 = ssub.s32 %s34, %s41
      %s132 = sor.u32 %s130, %s131
      %p133 = scmp.eq.s32.totalorder %s132, 0
      %s135 = sadd.s32 %s134, 1
      %s136 = scalar_select %p133, %s134, %s135
      %p139 = pneg %p133
      %p140 = scmp.eq.s32.totalorder %s26, 3
      %p141 = por %p139, %p140
      %p142 = scmp.ne.s32.totalorder %s134, %s137
      %p143 = scmp.eq.s32.totalorder %s26, 0
      %p144 = por %p142, %p143
      %p145 = scmp.ne.s32.totalorder %s134, %s137
      %p146 = scmp.eq.s32.totalorder %s31, 3
      %p147 = por %p145, %p146
      %p148 = scmp.ne.s32.totalorder %s137, %s138
      %p149 = scmp.eq.s32.totalorder %s31, 0
      %p150 = por %p148, %p149
      %p151 = scmp.ne.s32.totalorder %s137, %s138
      %p152 = scmp.eq.s32.totalorder %s32, 3
      %p153 = por %p151, %p152
      %p155 = scmp.ne.s32.totalorder %s138, %s154
      %p156 = scmp.eq.s32.totalorder %s32, 0
      %p157 = por %p155, %p156
      %s158 = ssub.s32 %s34, %s41
      %p159 = scmp.eq.s32.totalorder %s158, 0
      %s161 = sadd.s32 %s160, 1
      %s162 = scalar_select %p159, %s160, %s161
      %p165 = pneg %p159
      %p166 = scmp.eq.s32.totalorder %s26, 3
      %p167 = por %p165, %p166
      %p168 = scmp.ne.s32.totalorder %s160, %s163
      %p169 = scmp.eq.s32.totalorder %s26, 0
      %p170 = por %p168, %p169
      %p171 = scmp.ne.s32.totalorder %s160, %s163
      %p172 = scmp.eq.s32.totalorder %s31, 3
      %p173 = por %p171, %p172
      %p174 = scmp.ne.s32.totalorder %s163, %s164
      %p175 = scmp.eq.s32.totalorder %s31, 0
      %p176 = por %p174, %p175
      %p177 = scmp.ne.s32.totalorder %s163, %s164
      %p178 = scmp.eq.s32.totalorder %s32, 3
      %p179 = por %p177, %p178
      %p181 = scmp.ne.s32.totalorder %s164, %s180
      %p182 = scmp.eq.s32.totalorder %s32, 0
      %p183 = por %p181, %p182
      %s184 = ssub.s32 %s33, %s45
      %p185 = scmp.eq.s32.totalorder %s184, 0
      %s187 = sadd.s32 %s186, 1
      %s188 = scalar_select %p185, %s186, %s187
      %p191 = pneg %p185
      %p192 = scmp.eq.s32.totalorder %s26, 3
      %p193 = por %p191, %p192
      %p194 = scmp.ne.s32.totalorder %s186, %s189
      %p195 = scmp.eq.s32.totalorder %s26, 0
      %p196 = por %p194, %p195
      %p197 = scmp.ne.s32.totalorder %s186, %s189
      %p198 = scmp.eq.s32.totalorder %s31, 3
      %p199 = por %p197, %p198
      %p200 = scmp.ne.s32.totalorder %s189, %s190
      %p201 = scmp.eq.s32.totalorder %s31, 0
      %p202 = por %p200, %p201
      %p203 = scmp.ne.s32.totalorder %s189, %s190
      %p204 = scmp.eq.s32.totalorder %s32, 3
      %p205 = por %p203, %p204
      %p207 = scmp.ne.s32.totalorder %s190, %s206
      %p208 = scmp.eq.s32.totalorder %s32, 0
      %p209 = por %p207, %p208
      %s210 = ssub.s32 %s33, %s45
      %p211 = scmp.eq.s32.totalorder %s210, 0
      %s213 = sadd.s32 %s212, 1
      %s214 = scalar_select %p211, %s212, %s213
      %p217 = pneg %p211
      %p218 = scmp.eq.s32.totalorder %s26, 3
      %p219 = por %p217, %p218
      %p220 = scmp.ne.s32.totalorder %s212, %s215
      %p221 = scmp.eq.s32.totalorder %s26, 0
      %p222 = por %p220, %p221
      %p223 = scmp.ne.s32.totalorder %s212, %s215
      %p224 = scmp.eq.s32.totalorder %s31, 3
      %p225 = por %p223, %p224
      %p226 = scmp.ne.s32.totalorder %s215, %s216
      %p227 = scmp.eq.s32.totalorder %s31, 0
      %p228 = por %p226, %p227
      %p229 = scmp.ne.s32.totalorder %s215, %s216
      %p230 = scmp.eq.s32.totalorder %s32, 3
      %p231 = por %p229, %p230
      %p233 = scmp.ne.s32.totalorder %s216, %s232
      %p234 = scmp.eq.s32.totalorder %s32, 0
      %p235 = por %p233, %p234
      %s236 = ssub.s32 %s33, %s45
      %p237 = scmp.eq.s32.totalorder %s236, 0
      %s239 = sadd.s32 %s238, 1
      %s240 = scalar_select %p237, %s238, %s239
      %p243 = pneg %p237
      %p244 = scmp.eq.s32.totalorder %s26, 3
      %p245 = por %p243, %p244
      %p246 = scmp.ne.s32.totalorder %s238, %s241
      %p247 = scmp.eq.s32.totalorder %s26, 0
      %p248 = por %p246, %p247
      %p249 = scmp.ne.s32.totalorder %s238, %s241
      %p250 = scmp.eq.s32.totalorder %s31, 3
      %p251 = por %p249, %p250
      %p252 = scmp.ne.s32.totalorder %s241, %s242
      %p253 = scmp.eq.s32.totalorder %s31, 0
      %p254 = por %p252, %p253
      %p255 = scmp.ne.s32.totalorder %s241, %s242
      %p256 = scmp.eq.s32.totalorder %s32, 3
      %p257 = por %p255, %p256
      %p259 = scmp.ne.s32.totalorder %s242, %s258
      %p260 = scmp.eq.s32.totalorder %s32, 0
      %p261 = por %p259, %p260
      %s262 = ssub.s32 %s33, %s45
      %p263 = scmp.eq.s32.totalorder %s262, 0
      %s265 = sadd.s32 %s264, 1
      %s266 = scalar_select %p263, %s264, %s265
      %p269 = pneg %p263
      %p270 = scmp.eq.s32.totalorder %s26, 3
      %p271 = por %p269, %p270
      %p272 = scmp.ne.s32.totalorder %s264, %s267
      %p273 = scmp.eq.s32.totalorder %s26, 0
      %p274 = por %p272, %p273
      %p275 = scmp.ne.s32.totalorder %s264, %s267
      %p276 = scmp.eq.s32.totalorder %s31, 3
      %p277 = por %p275, %p276
      %p278 = scmp.ne.s32.totalorder %s267, %s268
      %p279 = scmp.eq.s32.totalorder %s31, 0
      %p280 = por %p278, %p279
      %p281 = scmp.ne.s32.totalorder %s267, %s268
      %p282 = scmp.eq.s32.totalorder %s32, 3
      %p283 = por %p281, %p282
      %p285 = scmp.ne.s32.totalorder %s268, %s284
      %p286 = scmp.eq.s32.totalorder %s32, 0
      %p287 = por %p285, %p286
      %s288 = ssub.s32 %s33, %s45
      %p289 = scmp.eq.s32.totalorder %s288, 0
      %s291 = sadd.s32 %s290, 1
      %s292 = scalar_select %p289, %s290, %s291
      %p295 = pneg %p289
      %p296 = scmp.eq.s32.totalorder %s26, 3
      %p297 = por %p295, %p296
      %p298 = scmp.ne.s32.totalorder %s290, %s293
      %p299 = scmp.eq.s32.totalorder %s26, 0
      %p300 = por %p298, %p299
      %p301 = scmp.ne.s32.totalorder %s290, %s293
      %p302 = scmp.eq.s32.totalorder %s31, 3
      %p303 = por %p301, %p302
      %p304 = scmp.ne.s32.totalorder %s293, %s294
      %p305 = scmp.eq.s32.totalorder %s31, 0
      %p306 = por %p304, %p305
      %p307 = scmp.ne.s32.totalorder %s293, %s294
      %p308 = scmp.eq.s32.totalorder %s32, 3
      %p309 = por %p307, %p308
      %p311 = scmp.ne.s32.totalorder %s294, %s310
      %p312 = scmp.eq.s32.totalorder %s32, 0
      %p313 = por %p311, %p312
      %s314 = ssub.s32 %s33, %s45
      %s315 = ssub.s32 %s34, %s41
      %s316 = sor.u32 %s314, %s315
      %p317 = scmp.eq.s32.totalorder %s316, 0
      %s319 = sadd.s32 %s318, 1
      %s320 = scalar_select %p317, %s318, %s319
      %p323 = pneg %p317
      %p324 = scmp.eq.s32.totalorder %s26, 3
      %p325 = por %p323, %p324
      %p326 = scmp.ne.s32.totalorder %s318, %s321
      %p327 = scmp.eq.s32.totalorder %s26, 0
      %p328 = por %p326, %p327
      %p329 = scmp.ne.s32.totalorder %s318, %s321
      %p330 = scmp.eq.s32.totalorder %s31, 3
      %p331 = por %p329, %p330
      %p332 = scmp.ne.s32.totalorder %s321, %s322
      %p333 = scmp.eq.s32.totalorder %s31, 0
      %p334 = por %p332, %p333
      %p335 = scmp.ne.s32.totalorder %s321, %s322
      %p336 = scmp.eq.s32.totalorder %s32, 3
      %p337 = por %p335, %p336
      %p339 = scmp.ne.s32.totalorder %s322, %s338
      %p340 = scmp.eq.s32.totalorder %s32, 0
      %p341 = por %p339, %p340
      %p342 = scmp.le.s32.totalorder 1, %s26
      %p343 = scmp.lt.s32.totalorder %s26, 5
      %p344 = pnand %p342, %p343
      %p345 = pneg %p344
      // Predicated region
      $region9: #{tpu_custom_call.1} parent=5 // pred_check
        _
      $region10: #{tpu_custom_call.1} parent=5 // pred_check_branch
        %347 = sbr.rel (%p344) target = $region12
      $region11: #{tpu_custom_call.1} parent=5 // pred_region
        %s348 = ssub.s32 %s26, 1
      $region12: #{tpu_custom_call.1} parent=5 // pred_fallthru
        _
      %p349 = scmp.lt.s32.totalorder %s26, 4
      // Predicated region
      $region13: #{tpu_custom_call.1} parent=5 // pred_check
        %p350 = pneg %p349
      $region14: #{tpu_custom_call.1} parent=5 // pred_check_branch
        %352 = sbr.rel (%p350) target = $region16
      $region15: #{tpu_custom_call.1} parent=5 // pred_region
        // Predicated region
        $region17: #{tpu_custom_call.1} parent=15 // pred_check
          %p353 = pneg %p60
        $region18: #{tpu_custom_call.1} parent=15 // pred_check_branch
          %355 = sbr.rel (%p353) target = $region20
        $region19: #{tpu_custom_call.1} parent=15 // pred_region
          %p356 = scmp.lt.s32.totalorder %s33, 1
          %s357 = scalar_select %p356, %s33, 1
          %p358 = scmp.lt.s32.totalorder %s34, 1
          %s359 = scalar_select %p358, %s34, 1
          %s360 = smul.addr %s357, 2
          %s361 = sadd.s32 %s359, %s360
          %s362 = smul.addr %s361, 4
          %s363 = scalar_lea.vmem %s1, %s362
        $region20: #{tpu_custom_call.1} parent=15 // pred_fallthru
          _
        // Predicated region
        $region21: #{tpu_custom_call.1} parent=15 // pred_check
          %p364 = pneg %p88
        $region22: #{tpu_custom_call.1} parent=15 // pred_check_branch
          %366 = sbr.rel (%p364) target = $region24
        $region23: #{tpu_custom_call.1} parent=15 // pred_region
          %p367 = scmp.lt.s32.totalorder %s33, 1
          %s368 = scalar_select %p367, %s33, 1
          %p369 = scmp.lt.s32.totalorder %s34, 1
          %s370 = scalar_select %p369, %s34, 1
          %s371 = smul.addr %s370, 4
          %s372 = smul.addr %s368, 8
          %s373 = sadd.s32 %s371, %s372
          %s374 = smul.addr %s373, 8
          %s375 = scalar_lea.vmem %s2, %s374
        $region24: #{tpu_custom_call.1} parent=15 // pred_fallthru
          _
        // Predicated region
        $region25: #{tpu_custom_call.1} parent=15 // pred_check
          %p376 = pneg %p116
        $region26: #{tpu_custom_call.1} parent=15 // pred_check_branch
          %378 = sbr.rel (%p376) target = $region28
        $region27: #{tpu_custom_call.1} parent=15 // pred_region
          %p379 = scmp.lt.s32.totalorder %s33, 1
          %s380 = scalar_select %p379, %s33, 1
          %p381 = scmp.lt.s32.totalorder %s34, 1
          %s382 = scalar_select %p381, %s34, 1
          %s383 = smul.addr %s382, 64
          %s384 = smul.addr %s380, 128
          %s385 = sadd.s32 %s383, %s384
          %s386 = smul.addr %s385, 8
          %s387 = scalar_lea.vmem %s3, %s386
        $region28: #{tpu_custom_call.1} parent=15 // pred_fallthru
          _
        // Predicated region
        $region29: #{tpu_custom_call.1} parent=15 // pred_check
          %p388 = pneg %p144
        $region30: #{tpu_custom_call.1} parent=15 // pred_check_branch
          %390 = sbr.rel (%p388) target = $region32
        $region31: #{tpu_custom_call.1} parent=15 // pred_region
          %p391 = scmp.lt.s32.totalorder %s33, 1
          %s392 = scalar_select %p391, %s33, 1
          %p393 = scmp.lt.s32.totalorder %s34, 1
          %s394 = scalar_select %p393, %s34, 1
          %s395 = smul.addr %s394, 4
          %s396 = smul.addr %s392, 8
          %s397 = sadd.s32 %s395, %s396
          %s398 = smul.addr %s397, 8
          %s399 = scalar_lea.vmem %s4, %s398
        $region32: #{tpu_custom_call.1} parent=15 // pred_fallthru
          _
        // Predicated region
        $region33: #{tpu_custom_call.1} parent=15 // pred_check
          %p400 = pneg %p170
        $region34: #{tpu_custom_call.1} parent=15 // pred_check_branch
          %402 = sbr.rel (%p400) target = $region36
        $region35: #{tpu_custom_call.1} parent=15 // pred_region
          %p403 = scmp.lt.s32.totalorder %s34, 1
          %s404 = scalar_select %p403, %s34, 1
          %s405 = smul.addr %s404, 8
          %s406 = scalar_lea.vmem %s5, %s405
        $region36: #{tpu_custom_call.1} parent=15 // pred_fallthru
          _
        // Predicated region
        $region37: #{tpu_custom_call.1} parent=15 // pred_check
          %p407 = pneg %p196
        $region38: #{tpu_custom_call.1} parent=15 // pred_check_branch
          %409 = sbr.rel (%p407) target = $region40
        $region39: #{tpu_custom_call.1} parent=15 // pred_region
          %p410 = scmp.lt.s32.totalorder %s33, 1
          %s411 = scalar_select %p410, %s33, 1
          %s412 = scalar_lea.vmem %s6, %s411
        $region40: #{tpu_custom_call.1} parent=15 // pred_fallthru
          _
        // Predicated region
        $region41: #{tpu_custom_call.1} parent=15 // pred_check
          %p413 = pneg %p222
        $region42: #{tpu_custom_call.1} parent=15 // pred_check_branch
          %415 = sbr.rel (%p413) target = $region44
        $region43: #{tpu_custom_call.1} parent=15 // pred_region
          %p416 = scmp.lt.s32.totalorder %s33, 1
          %s417 = scalar_select %p416, %s33, 1
          %s418 = scalar_lea.vmem %s7, %s417
        $region44: #{tpu_custom_call.1} parent=15 // pred_fallthru
          _
        // Predicated region
        $region45: #{tpu_custom_call.1} parent=15 // pred_check
          %p419 = pneg %p248
        $region46: #{tpu_custom_call.1} parent=15 // pred_check_branch
          %421 = sbr.rel (%p419) target = $region48
        $region47: #{tpu_custom_call.1} parent=15 // pred_region
          %p422 = scmp.lt.s32.totalorder %s33, 1
          %s423 = scalar_select %p422, %s33, 1
          %s424 = smul.addr %s423, 16
          %s425 = smul.addr %s424, 8
          %s426 = scalar_lea.vmem %s8, %s425
        $region48: #{tpu_custom_call.1} parent=15 // pred_fallthru
          _
        // Predicated region
        $region49: #{tpu_custom_call.1} parent=15 // pred_check
          %p427 = pneg %p274
        $region50: #{tpu_custom_call.1} parent=15 // pred_check_branch
          %429 = sbr.rel (%p427) target = $region52
        $region51: #{tpu_custom_call.1} parent=15 // pred_region
          %p430 = scmp.lt.s32.totalorder %s33, 1
          %s431 = scalar_select %p430, %s33, 1
          %s432 = smul.addr %s431, 4
          %s433 = smul.addr %s432, 8
          %s434 = scalar_lea.vmem %s9, %s433
        $region52: #{tpu_custom_call.1} parent=15 // pred_fallthru
          _
        // Predicated region
        $region53: #{tpu_custom_call.1} parent=15 // pred_check
          %p435 = pneg %p300
        $region54: #{tpu_custom_call.1} parent=15 // pred_check_branch
          %437 = sbr.rel (%p435) target = $region56
        $region55: #{tpu_custom_call.1} parent=15 // pred_region
          %p438 = scmp.lt.s32.totalorder %s33, 1
          %s439 = scalar_select %p438, %s33, 1
          %s440 = scalar_lea.vmem %s10, %s439
        $region56: #{tpu_custom_call.1} parent=15 // pred_fallthru
          _
      $region16: #{tpu_custom_call.1} parent=5 // pred_fallthru
        _
      %p441 = scmp.le.s32.totalorder 1, %s26
      %p442 = scmp.lt.s32.totalorder %s26, 5
      %p443 = pnand %p441, %p442
      %p444 = pneg %p443
      // Predicated region
      $region57: #{tpu_custom_call.1} parent=5 // pred_check
        _
      $region58: #{tpu_custom_call.1} parent=5 // pred_check_branch
        %446 = sbr.rel (%p443) target = $region60
      $region59: #{tpu_custom_call.1} parent=5 // pred_region
        %s447 = ssub.s32 %s26, 1
        %p448 = scmp.lt.s32.totalorder %s35, 1
        %s449 = scalar_select %p448, %s35, 1
        %p450 = scmp.lt.s32.totalorder %s36, 1
        %s451 = scalar_select %p450, %s36, 1
        %s452 = smul.addr %s449, 2
        %s453 = sadd.s32 %s451, %s452
        %s454 = smul.addr %s453, 4
        %s455 = scalar_lea.vmem %s1, %s454
        %p456 = pneg %p66
        %p457 = pneg %p63
        %p458 = scmp.lt.s32.totalorder %s35, 1
        %s459 = scalar_select %p458, %s35, 1
        %p460 = scmp.lt.s32.totalorder %s36, 1
        %s461 = scalar_select %p460, %s36, 1
        %s462 = smul.addr %s461, 4
        %s463 = smul.addr %s459, 8
        %s464 = sadd.s32 %s462, %s463
        %s465 = smul.addr %s464, 8
        %s466 = scalar_lea.vmem %s2, %s465
        %p467 = pneg %p94
        %p468 = pneg %p91
        %p469 = scmp.lt.s32.totalorder %s35, 1
        %s470 = scalar_select %p469, %s35, 1
        %p471 = scmp.lt.s32.totalorder %s36, 1
        %s472 = scalar_select %p471, %s36, 1
        %s473 = smul.addr %s472, 64
        %s474 = smul.addr %s470, 128
        %s475 = sadd.s32 %s473, %s474
        %s476 = smul.addr %s475, 8
        %s477 = scalar_lea.vmem %s3, %s476
        %p478 = pneg %p122
        %p479 = pneg %p119
        %p480 = scmp.lt.s32.totalorder %s35, 1
        %s481 = scalar_select %p480, %s35, 1
        %p482 = scmp.lt.s32.totalorder %s36, 1
        %s483 = scalar_select %p482, %s36, 1
        %s484 = smul.addr %s483, 4
        %s485 = smul.addr %s481, 8
        %s486 = sadd.s32 %s484, %s485
        %s487 = smul.addr %s486, 8
        %s488 = scalar_lea.vmem %s4, %s487
        %p489 = pneg %p150
        %p490 = pneg %p147
        %p491 = scmp.lt.s32.totalorder %s36, 1
        %s492 = scalar_select %p491, %s36, 1
        %s493 = smul.addr %s492, 8
        %s494 = scalar_lea.vmem %s5, %s493
        %p495 = pneg %p176
        %p496 = pneg %p173
        %p497 = scmp.lt.s32.totalorder %s35, 1
        %s498 = scalar_select %p497, %s35, 1
        %s499 = scalar_lea.vmem %s6, %s498
        %p500 = pneg %p202
        %p501 = pneg %p199
        %p502 = scmp.lt.s32.totalorder %s35, 1
        %s503 = scalar_select %p502, %s35, 1
        %s504 = scalar_lea.vmem %s7, %s503
        %p505 = pneg %p228
        %p506 = pneg %p225
        %p507 = scmp.lt.s32.totalorder %s35, 1
        %s508 = scalar_select %p507, %s35, 1
        %s509 = smul.addr %s508, 16
        %s510 = smul.addr %s509, 8
        %s511 = scalar_lea.vmem %s8, %s510
        %p512 = pneg %p254
        %p513 = pneg %p251
        %p514 = scmp.lt.s32.totalorder %s35, 1
        %s515 = scalar_select %p514, %s35, 1
        %s516 = smul.addr %s515, 4
        %s517 = smul.addr %s516, 8
        %s518 = scalar_lea.vmem %s9, %s517
        %p519 = pneg %p280
        %p520 = pneg %p277
        %p521 = scmp.lt.s32.totalorder %s35, 1
        %s522 = scalar_select %p521, %s35, 1
        %s523 = scalar_lea.vmem %s10, %s522
        %p524 = pneg %p306
        %p525 = pneg %p303
        %p526 = pneg %p334
        %p527 = pneg %p331
        %s528 = sand.u32 %s321, 1
        %s529 = scalar_lea.sflag [#allocation6], %s528
        %s530 = sand.u32 %s321, 1
        %s531 = smul.addr %s530, 8
        %s532 = scalar_lea.vmem [#allocation5], %s531
        %p533 = scmp.lt.s32.totalorder %s35, 1
        %s534 = scalar_select %p533, %s35, 1
        %p535 = scmp.lt.s32.totalorder %s36, 1
        %s536 = scalar_select %p535, %s36, 1
        %s537 = smul.addr %s534, 2
        %s538 = sadd.s32 %s536, %s537
        %s539 = smul.addr %s538, 4
        %s540 = scalar_lea.vmem %s1, %s539
        %p541 = scmp.lt.s32.totalorder %s35, 1
        %s542 = scalar_select %p541, %s35, 1
        %p543 = scmp.lt.s32.totalorder %s36, 1
        %s544 = scalar_select %p543, %s36, 1
        %s545 = smul.addr %s544, 4
        %s546 = smul.addr %s542, 8
        %s547 = sadd.s32 %s545, %s546
        %s548 = smul.addr %s547, 8
        %s549 = scalar_lea.vmem %s2, %s548
        %p550 = scmp.lt.s32.totalorder %s35, 1
        %s551 = scalar_select %p550, %s35, 1
        %p552 = scmp.lt.s32.totalorder %s36, 1
        %s553 = scalar_select %p552, %s36, 1
        %s554 = smul.addr %s553, 64
        %s555 = smul.addr %s551, 128
        %s556 = sadd.s32 %s554, %s555
        %s557 = smul.addr %s556, 8
        %s558 = scalar_lea.vmem %s3, %s557
        %p559 = scmp.lt.s32.totalorder %s35, 1
        %s560 = scalar_select %p559, %s35, 1
        %p561 = scmp.lt.s32.totalorder %s36, 1
        %s562 = scalar_select %p561, %s36, 1
        %s563 = smul.addr %s562, 4
        %s564 = smul.addr %s560, 8
        %s565 = sadd.s32 %s563, %s564
        %s566 = smul.addr %s565, 8
        %s567 = scalar_lea.vmem %s4, %s566
        %p568 = scmp.lt.s32.totalorder %s36, 1
        %s569 = scalar_select %p568, %s36, 1
        %s570 = smul.addr %s569, 8
        %s571 = scalar_lea.vmem %s5, %s570
        %p572 = scmp.lt.s32.totalorder %s35, 1
        %s573 = scalar_select %p572, %s35, 1
        %s574 = scalar_lea.vmem %s6, %s573
        %p575 = scmp.lt.s32.totalorder %s35, 1
        %s576 = scalar_select %p575, %s35, 1
        %s577 = scalar_lea.vmem %s7, %s576
        %p578 = scmp.lt.s32.totalorder %s35, 1
        %s579 = scalar_select %p578, %s35, 1
        %s580 = smul.addr %s579, 16
        %s581 = smul.addr %s580, 8
        %s582 = scalar_lea.vmem %s8, %s581
        %p583 = scmp.lt.s32.totalorder %s35, 1
        %s584 = scalar_select %p583, %s35, 1
        %s585 = smul.addr %s584, 4
        %s586 = smul.addr %s585, 8
        %s587 = scalar_lea.vmem %s9, %s586
        %p588 = scmp.lt.s32.totalorder %s35, 1
        %s589 = scalar_select %p588, %s35, 1
        %s590 = scalar_lea.vmem %s10, %s589
        %v591 = vlaneseq
        %v592 = vshrl.u32 %v591, 7
        %v593 = vlaneseq
        %v594 = vand.u32 %v593, 127
        %s595 = smul.u32 %s36, 128
        %s596 = sld [smem:[#allocation4 + %s595]]
        %vm597 = vcmp.eq.s32.totalorder %v592, 0
        %v598 = vstv %s596
        %vm599 = vcmp.eq.s32.totalorder %v594, %v598
        %vm600 = vmand %vm597, %vm599
        %v601 = vsel %vm600, 1.0, 0.0
        %s602 = sadd.s32 %s595, 1
        %s603 = sld [smem:[#allocation4 + %s602]]
        %vm604 = vcmp.eq.s32.totalorder %v592, 1
        %v605 = vstv %s603
        %vm606 = vcmp.eq.s32.totalorder %v594, %v605
        %vm607 = vmand %vm604, %vm606
        %v608 = vsel %vm607, 1.0, %v601
        %s609 = sadd.s32 %s595, 2
        %s610 = sld [smem:[#allocation4 + %s609]]
        %vm611 = vcmp.eq.s32.totalorder %v592, 2
        %v612 = vstv %s610
        %vm613 = vcmp.eq.s32.totalorder %v594, %v612
        %vm614 = vmand %vm611, %vm613
        %v615 = vsel %vm614, 1.0, %v608
        %s616 = sadd.s32 %s595, 3
        %s617 = sld [smem:[#allocation4 + %s616]]
        %vm618 = vcmp.eq.s32.totalorder %v592, 3
        %v619 = vstv %s617
        %vm620 = vcmp.eq.s32.totalorder %v594, %v619
        %vm621 = vmand %vm618, %vm620
        %v622 = vsel %vm621, 1.0, %v615
        %s623 = sadd.s32 %s595, 4
        %s624 = sld [smem:[#allocation4 + %s623]]
        %vm625 = vcmp.eq.s32.totalorder %v592, 4
        %v626 = vstv %s624
        %vm627 = vcmp.eq.s32.totalorder %v594, %v626
        %vm628 = vmand %vm625, %vm627
        %v629 = vsel %vm628, 1.0, %v622
        %s630 = sadd.s32 %s595, 5
        %s631 = sld [smem:[#allocation4 + %s630]]
        %vm632 = vcmp.eq.s32.totalorder %v592, 5
        %v633 = vstv %s631
        %vm634 = vcmp.eq.s32.totalorder %v594, %v633
        %vm635 = vmand %vm632, %vm634
        %v636 = vsel %vm635, 1.0, %v629
        %s637 = sadd.s32 %s595, 6
        %s638 = sld [smem:[#allocation4 + %s637]]
        %vm639 = vcmp.eq.s32.totalorder %v592, 6
        %v640 = vstv %s638
        %vm641 = vcmp.eq.s32.totalorder %v594, %v640
        %vm642 = vmand %vm639, %vm641
        %v643 = vsel %vm642, 1.0, %v636
        %s644 = sadd.s32 %s595, 7
        %s645 = sld [smem:[#allocation4 + %s644]]
        %vm646 = vcmp.eq.s32.totalorder %v592, 7
        %v647 = vstv %s645
        %vm648 = vcmp.eq.s32.totalorder %v594, %v647
        %vm649 = vmand %vm646, %vm648
        %v650 = vsel %vm649, 1.0, %v643
        %v651 = vld [vmem:[%s540] sm:$0xf]
        %vm652 = vcmask 31744
        %v654 = vsel %vm652, %v650, 0
        %vm656 = vcmask 1043456
        %v658 = vsel %vm656, %v651, 0
        %660 = vmatprep.subr.mxu0 0.0
        %661 = vmatpush1.msra.mxu0 %v658
        %662 = vmatprep.subr.mxu0 0.0
        %663 = vmatpush1.msra.mxu0 0.0
        %664 = vmatprep.subr.mxu0 0.0
        %665 = vmatpush1.msra.mxu0 0.0
        %666 = vmatprep.subr.mxu0 0.0
        %667 = vmatpush1.msra.mxu0 0.0
        %668 = vmatprep.subr.mxu0 0.0
        %669 = vmatpush1.msra.mxu0 0.0
        %670 = vmatprep.subr.mxu0 0.0
        %671 = vmatpush1.msra.mxu0 0.0
        %672 = vmatprep.subr.mxu0 0.0
        %673 = vmatpush1.msra.mxu0 0.0
        %674 = vmatprep.subr.mxu0 0.0
        %675 = vmatpush1.msra.mxu0 0.0
        %676 = vmatprep.subr.mxu0 0.0
        %677 = vmatpush1.msra.mxu0 0.0
        %678 = vmatprep.subr.mxu0 0.0
        %679 = vmatpush1.msra.mxu0 0.0
        %680 = vmatprep.subr.mxu0 0.0
        %681 = vmatpush1.msra.mxu0 0.0
        %682 = vmatprep.subr.mxu0 0.0
        %683 = vmatpush1.msra.mxu0 0.0
        %684 = vmatprep.subr.mxu0 0.0
        %685 = vmatpush1.msra.mxu0 0.0
        %686 = vmatprep.subr.mxu0 0.0
        %687 = vmatpush1.msra.mxu0 0.0
        %688 = vmatprep.subr.mxu0 0.0
        %689 = vmatpush1.msra.mxu0 0.0
        %690 = vmatprep.subr.mxu0 0.0
        %691 = vmatpush1.msra.mxu0 0.0
        %692 = vmatprep.subr.mxu0 0.0
        %693 = vmatpush1.msra.mxu0 0.0
        %694 = vmatprep.subr.mxu0 0.0
        %695 = vmatpush1.msra.mxu0 0.0
        %696 = vmatprep.subr.mxu0 0.0
        %697 = vmatpush1.msra.mxu0 0.0
        %698 = vmatprep.subr.mxu0 0.0
        %699 = vmatpush1.msra.mxu0 0.0
        %700 = vmatprep.subr.mxu0 0.0
        %701 = vmatpush1.msra.mxu0 0.0
        %702 = vmatprep.subr.mxu0 0.0
        %703 = vmatpush1.msra.mxu0 0.0
        %704 = vmatprep.subr.mxu0 0.0
        %705 = vmatpush1.msra.mxu0 0.0
        %706 = vmatprep.subr.mxu0 0.0
        %707 = vmatpush1.msra.mxu0 0.0
        %708 = vmatprep.subr.mxu0 0.0
        %709 = vmatpush1.msra.mxu0 0.0
        %710 = vmatprep.subr.mxu0 0.0
        %711 = vmatpush1.msra.mxu0 0.0
        %712 = vmatprep.subr.mxu0 0.0
        %713 = vmatpush1.msra.mxu0 0.0
        %714 = vmatprep.subr.mxu0 0.0
        %715 = vmatpush1.msra.mxu0 0.0
        %716 = vmatprep.subr.mxu0 0.0
        %717 = vmatpush1.msra.mxu0 0.0
        %718 = vmatprep.subr.mxu0 0.0
        %719 = vmatpush1.msra.mxu0 0.0
        %720 = vmatprep.subr.mxu0 0.0
        %721 = vmatpush1.msra.mxu0 0.0
        %722 = vmatprep.subr.mxu0 0.0
        %723 = vmatpush1.msra.mxu0 0.0
        %724 = vmatprep.mubr.f32.mxu0 0.0
        %725 = vmatmul.mubr.f32.gmra.mrb[0].mxu0 %v654
        %v726 = vpop.f32.mrb[0].mxu0
        %v727 = vadd.f32 0.0, %v726
        %v728 = vpop.f32.mrb[0].mxu0
        %729 = vdwg.mxu0
        %vm730 = vcmask 261120
        %v731 = vsel %vm730, %v727, 0.0
        %v732 = vrot.slane %v731, 4
        %v733 = vadd.f32 %v731, %v732
        %v734 = vrot.slane %v733, 2
        %v735 = vadd.f32 %v733, %v734
        %v736 = vrot.slane %v735, 1
        %v737 = vadd.f32 %v735, %v736
        %v738 = vrcp.pop 8.0
        %v739 = vmul.f32 %v737, %v738
        %v740 = vsub.f32 %v727, %v739
        %v741 = vmul.f32 %v740, %v740
        %v742 = vsel %vm730, %v741, 0.0
        %v743 = vrot.slane %v742, 4
        %v744 = vadd.f32 %v742, %v743
        %v745 = vrot.slane %v744, 2
        %v746 = vadd.f32 %v744, %v745
        %v747 = vrot.slane %v746, 1
        %v748 = vadd.f32 %v746, %v747
        %v749 = vmul.f32 %v748, %v738
        %v750 = vadd.f32 %v749, 1e-05
        %v751 = vrsqrt.pop %v750
        %v752 = vmul.f32 %v740, %v751
        %v753 = vld [vmem:[%s574] sm:$0x1]
        %v755 = vlaneseq
        %v756 = vshrl.u32 %v755, 7
        %v757 = vsub.s32 0, %v756
        %v758 = vrot.slane %v753, %v757
        %v760 = vmul.f32 %v752, %v758
        %v761 = vld [vmem:[%s577] sm:$0x1]
        %v763 = vlaneseq
        %v764 = vshrl.u32 %v763, 7
        %v765 = vsub.s32 0, %v764
        %v766 = vrot.slane %v761, %v765
        %v768 = vadd.f32 %v760, %v766
        %v769 = vld [vmem:[%s582] sm:$0xff]
        %v770 = vld [vmem:[%s582 + $0x8] sm:$0xff]
        %v771 = vld [vmem:[%s582 + $0x10] sm:$0xff]
        %v772 = vld [vmem:[%s582 + $0x18] sm:$0xff]
        %v773 = vld [vmem:[%s582 + $0x20] sm:$0xff]
        %v774 = vld [vmem:[%s582 + $0x28] sm:$0xff]
        %v775 = vld [vmem:[%s582 + $0x30] sm:$0xff]
        %v776 = vld [vmem:[%s582 + $0x38] sm:$0xff]
        %v777 = vld [vmem:[%s582 + $0x40] sm:$0xff]
        %v778 = vld [vmem:[%s582 + $0x48] sm:$0xff]
        %v779 = vld [vmem:[%s582 + $0x50] sm:$0xff]
        %v780 = vld [vmem:[%s582 + $0x58] sm:$0xff]
        %v781 = vld [vmem:[%s582 + $0x60] sm:$0xff]
        %v782 = vld [vmem:[%s582 + $0x68] sm:$0xff]
        %v783 = vld [vmem:[%s582 + $0x70] sm:$0xff]
        %v784 = vld [vmem:[%s582 + $0x78] sm:$0xff]
        %v786 = vsel %vm730, %v768, 0
        %788 = vmatprep.subr.mxu0 0.0
        %789 = vmatpush1.msra.mxu0 %v769
        %790 = vmatprep.subr.mxu0 0.0
        %791 = vmatpush1.msra.mxu0 %v770
        %792 = vmatprep.subr.mxu0 0.0
        %793 = vmatpush1.msra.mxu0 %v771
        %794 = vmatprep.subr.mxu0 0.0
        %795 = vmatpush1.msra.mxu0 %v772
        %796 = vmatprep.subr.mxu0 0.0
        %797 = vmatpush1.msra.mxu0 0.0
        %798 = vmatprep.subr.mxu0 0.0
        %799 = vmatpush1.msra.mxu0 0.0
        %800 = vmatprep.subr.mxu0 0.0
        %801 = vmatpush1.msra.mxu0 0.0
        %802 = vmatprep.subr.mxu0 0.0
        %803 = vmatpush1.msra.mxu0 0.0
        %804 = vmatprep.subr.mxu0 0.0
        %805 = vmatpush1.msra.mxu0 0.0
        %806 = vmatprep.subr.mxu0 0.0
        %807 = vmatpush1.msra.mxu0 0.0
        %808 = vmatprep.subr.mxu0 0.0
        %809 = vmatpush1.msra.mxu0 0.0
        %810 = vmatprep.subr.mxu0 0.0
        %811 = vmatpush1.msra.mxu0 0.0
        %812 = vmatprep.subr.mxu0 0.0
        %813 = vmatpush1.msra.mxu0 0.0
        %814 = vmatprep.subr.mxu0 0.0
        %815 = vmatpush1.msra.mxu0 0.0
        %816 = vmatprep.subr.mxu0 0.0
        %817 = vmatpush1.msra.mxu0 0.0
        %818 = vmatprep.subr.mxu0 0.0
        %819 = vmatpush1.msra.mxu0 0.0
        %820 = vmatprep.subr.mxu0 0.0
        %821 = vmatpush1.msra.mxu0 0.0
        %822 = vmatprep.subr.mxu0 0.0
        %823 = vmatpush1.msra.mxu0 0.0
        %824 = vmatprep.subr.mxu0 0.0
        %825 = vmatpush1.msra.mxu0 0.0
        %826 = vmatprep.subr.mxu0 0.0
        %827 = vmatpush1.msra.mxu0 0.0
        %828 = vmatprep.subr.mxu0 0.0
        %829 = vmatpush1.msra.mxu0 0.0
        %830 = vmatprep.subr.mxu0 0.0
        %831 = vmatpush1.msra.mxu0 0.0
        %832 = vmatprep.subr.mxu0 0.0
        %833 = vmatpush1.msra.mxu0 0.0
        %834 = vmatprep.subr.mxu0 0.0
        %835 = vmatpush1.msra.mxu0 0.0
        %836 = vmatprep.subr.mxu0 0.0
        %837 = vmatpush1.msra.mxu0 0.0
        %838 = vmatprep.subr.mxu0 0.0
        %839 = vmatpush1.msra.mxu0 0.0
        %840 = vmatprep.subr.mxu0 0.0
        %841 = vmatpush1.msra.mxu0 0.0
        %842 = vmatprep.subr.mxu0 0.0
        %843 = vmatpush1.msra.mxu0 0.0
        %844 = vmatprep.subr.mxu0 0.0
        %845 = vmatpush1.msra.mxu0 0.0
        %846 = vmatprep.subr.mxu0 0.0
        %847 = vmatpush1.msra.mxu0 0.0
        %848 = vmatprep.subr.mxu0 0.0
        %849 = vmatpush1.msra.mxu0 0.0
        %850 = vmatprep.subr.mxu0 0.0
        %851 = vmatpush1.msra.mxu0 0.0
        %852 = vmatprep.mubr.f32.mxu0 0.0
        %853 = vmatmul.mubr.f32.gmra.mrb[0].mxu0 %v786
        %v854 = vpop.f32.mrb[0].mxu0
        %v855 = vadd.f32 0.0, %v854
        %v856 = vpop.f32.mrb[0].mxu0
        %857 = vdwg.mxu0
        %858 = vmatprep.subr.mxu0 0.0
        %859 = vmatpush1.msra.mxu0 %v773
        %860 = vmatprep.subr.mxu0 0.0
        %861 = vmatpush1.msra.mxu0 %v774
        %862 = vmatprep.subr.mxu0 0.0
        %863 = vmatpush1.msra.mxu0 %v775
        %864 = vmatprep.subr.mxu0 0.0
        %865 = vmatpush1.msra.mxu0 %v776
        %866 = vmatprep.subr.mxu0 0.0
        %867 = vmatpush1.msra.mxu0 0.0
        %868 = vmatprep.subr.mxu0 0.0
        %869 = vmatpush1.msra.mxu0 0.0
        %870 = vmatprep.subr.mxu0 0.0
        %871 = vmatpush1.msra.mxu0 0.0
        %872 = vmatprep.subr.mxu0 0.0
        %873 = vmatpush1.msra.mxu0 0.0
        %874 = vmatprep.subr.mxu0 0.0
        %875 = vmatpush1.msra.mxu0 0.0
        %876 = vmatprep.subr.mxu0 0.0
        %877 = vmatpush1.msra.mxu0 0.0
        %878 = vmatprep.subr.mxu0 0.0
        %879 = vmatpush1.msra.mxu0 0.0
        %880 = vmatprep.subr.mxu0 0.0
        %881 = vmatpush1.msra.mxu0 0.0
        %882 = vmatprep.subr.mxu0 0.0
        %883 = vmatpush1.msra.mxu0 0.0
        %884 = vmatprep.subr.mxu0 0.0
        %885 = vmatpush1.msra.mxu0 0.0
        %886 = vmatprep.subr.mxu0 0.0
        %887 = vmatpush1.msra.mxu0 0.0
        %888 = vmatprep.subr.mxu0 0.0
        %889 = vmatpush1.msra.mxu0 0.0
        %890 = vmatprep.subr.mxu0 0.0
        %891 = vmatpush1.msra.mxu0 0.0
        %892 = vmatprep.subr.mxu0 0.0
        %893 = vmatpush1.msra.mxu0 0.0
        %894 = vmatprep.subr.mxu0 0.0
        %895 = vmatpush1.msra.mxu0 0.0
        %896 = vmatprep.subr.mxu0 0.0
        %897 = vmatpush1.msra.mxu0 0.0
        %898 = vmatprep.subr.mxu0 0.0
        %899 = vmatpush1.msra.mxu0 0.0
        %900 = vmatprep.subr.mxu0 0.0
        %901 = vmatpush1.msra.mxu0 0.0
        %902 = vmatprep.subr.mxu0 0.0
        %903 = vmatpush1.msra.mxu0 0.0
        %904 = vmatprep.subr.mxu0 0.0
        %905 = vmatpush1.msra.mxu0 0.0
        %906 = vmatprep.subr.mxu0 0.0
        %907 = vmatpush1.msra.mxu0 0.0
        %908 = vmatprep.subr.mxu0 0.0
        %909 = vmatpush1.msra.mxu0 0.0
        %910 = vmatprep.subr.mxu0 0.0
        %911 = vmatpush1.msra.mxu0 0.0
        %912 = vmatprep.subr.mxu0 0.0
        %913 = vmatpush1.msra.mxu0 0.0
        %914 = vmatprep.subr.mxu0 0.0
        %915 = vmatpush1.msra.mxu0 0.0
        %916 = vmatprep.subr.mxu0 0.0
        %917 = vmatpush1.msra.mxu0 0.0
        %918 = vmatprep.subr.mxu0 0.0
        %919 = vmatpush1.msra.mxu0 0.0
        %920 = vmatprep.subr.mxu0 0.0
        %921 = vmatpush1.msra.mxu0 0.0
        %922 = vmatprep.mubr.f32.mxu0 0.0
        %923 = vmatmul.mubr.f32.gmra.mrb[0].mxu0 %v786
        %v924 = vpop.f32.mrb[0].mxu0
        %v925 = vadd.f32 0.0, %v924
        %v926 = vpop.f32.mrb[0].mxu0
        %927 = vdwg.mxu0
        %928 = vmatprep.subr.mxu0 0.0
        %929 = vmatpush1.msra.mxu0 %v777
        %930 = vmatprep.subr.mxu0 0.0
        %931 = vmatpush1.msra.mxu0 %v778
        %932 = vmatprep.subr.mxu0 0.0
        %933 = vmatpush1.msra.mxu0 %v779
        %934 = vmatprep.subr.mxu0 0.0
        %935 = vmatpush1.msra.mxu0 %v780
        %936 = vmatprep.subr.mxu0 0.0
        %937 = vmatpush1.msra.mxu0 0.0
        %938 = vmatprep.subr.mxu0 0.0
        %939 = vmatpush1.msra.mxu0 0.0
        %940 = vmatprep.subr.mxu0 0.0
        %941 = vmatpush1.msra.mxu0 0.0
        %942 = vmatprep.subr.mxu0 0.0
        %943 = vmatpush1.msra.mxu0 0.0
        %944 = vmatprep.subr.mxu0 0.0
        %945 = vmatpush1.msra.mxu0 0.0
        %946 = vmatprep.subr.mxu0 0.0
        %947 = vmatpush1.msra.mxu0 0.0
        %948 = vmatprep.subr.mxu0 0.0
        %949 = vmatpush1.msra.mxu0 0.0
        %950 = vmatprep.subr.mxu0 0.0
        %951 = vmatpush1.msra.mxu0 0.0
        %952 = vmatprep.subr.mxu0 0.0
        %953 = vmatpush1.msra.mxu0 0.0
        %954 = vmatprep.subr.mxu0 0.0
        %955 = vmatpush1.msra.mxu0 0.0
        %956 = vmatprep.subr.mxu0 0.0
        %957 = vmatpush1.msra.mxu0 0.0
        %958 = vmatprep.subr.mxu0 0.0
        %959 = vmatpush1.msra.mxu0 0.0
        %960 = vmatprep.subr.mxu0 0.0
        %961 = vmatpush1.msra.mxu0 0.0
        %962 = vmatprep.subr.mxu0 0.0
        %963 = vmatpush1.msra.mxu0 0.0
        %964 = vmatprep.subr.mxu0 0.0
        %965 = vmatpush1.msra.mxu0 0.0
        %966 = vmatprep.subr.mxu0 0.0
        %967 = vmatpush1.msra.mxu0 0.0
        %968 = vmatprep.subr.mxu0 0.0
        %969 = vmatpush1.msra.mxu0 0.0
        %970 = vmatprep.subr.mxu0 0.0
        %971 = vmatpush1.msra.mxu0 0.0
        %972 = vmatprep.subr.mxu0 0.0
        %973 = vmatpush1.msra.mxu0 0.0
        %974 = vmatprep.subr.mxu0 0.0
        %975 = vmatpush1.msra.mxu0 0.0
        %976 = vmatprep.subr.mxu0 0.0
        %977 = vmatpush1.msra.mxu0 0.0
        %978 = vmatprep.subr.mxu0 0.0
        %979 = vmatpush1.msra.mxu0 0.0
        %980 = vmatprep.subr.mxu0 0.0
        %981 = vmatpush1.msra.mxu0 0.0
        %982 = vmatprep.subr.mxu0 0.0
        %983 = vmatpush1.msra.mxu0 0.0
        %984 = vmatprep.subr.mxu0 0.0
        %985 = vmatpush1.msra.mxu0 0.0
        %986 = vmatprep.subr.mxu0 0.0
        %987 = vmatpush1.msra.mxu0 0.0
        %988 = vmatprep.subr.mxu0 0.0
        %989 = vmatpush1.msra.mxu0 0.0
        %990 = vmatprep.subr.mxu0 0.0
        %991 = vmatpush1.msra.mxu0 0.0
        %992 = vmatprep.mubr.f32.mxu0 0.0
        %993 = vmatmul.mubr.f32.gmra.mrb[0].mxu0 %v786
        %v994 = vpop.f32.mrb[0].mxu0
        %v995 = vadd.f32 0.0, %v994
        %v996 = vpop.f32.mrb[0].mxu0
        %997 = vdwg.mxu0
        %998 = vmatprep.subr.mxu0 0.0
        %999 = vmatpush1.msra.mxu0 %v781
        %1000 = vmatprep.subr.mxu0 0.0
        %1001 = vmatpush1.msra.mxu0 %v782
        %1002 = vmatprep.subr.mxu0 0.0
        %1003 = vmatpush1.msra.mxu0 %v783
        %1004 = vmatprep.subr.mxu0 0.0
        %1005 = vmatpush1.msra.mxu0 %v784
        %1006 = vmatprep.subr.mxu0 0.0
        %1007 = vmatpush1.msra.mxu0 0.0
        %1008 = vmatprep.subr.mxu0 0.0
        %1009 = vmatpush1.msra.mxu0 0.0
        %1010 = vmatprep.subr.mxu0 0.0
        %1011 = vmatpush1.msra.mxu0 0.0
        %1012 = vmatprep.subr.mxu0 0.0
        %1013 = vmatpush1.msra.mxu0 0.0
        %1014 = vmatprep.subr.mxu0 0.0
        %1015 = vmatpush1.msra.mxu0 0.0
        %1016 = vmatprep.subr.mxu0 0.0
        %1017 = vmatpush1.msra.mxu0 0.0
        %1018 = vmatprep.subr.mxu0 0.0
        %1019 = vmatpush1.msra.mxu0 0.0
        %1020 = vmatprep.subr.mxu0 0.0
        %1021 = vmatpush1.msra.mxu0 0.0
        %1022 = vmatprep.subr.mxu0 0.0
        %1023 = vmatpush1.msra.mxu0 0.0
        %1024 = vmatprep.subr.mxu0 0.0
        %1025 = vmatpush1.msra.mxu0 0.0
        %1026 = vmatprep.subr.mxu0 0.0
        %1027 = vmatpush1.msra.mxu0 0.0
        %1028 = vmatprep.subr.mxu0 0.0
        %1029 = vmatpush1.msra.mxu0 0.0
        %1030 = vmatprep.subr.mxu0 0.0
        %1031 = vmatpush1.msra.mxu0 0.0
        %1032 = vmatprep.subr.mxu0 0.0
        %1033 = vmatpush1.msra.mxu0 0.0
        %1034 = vmatprep.subr.mxu0 0.0
        %1035 = vmatpush1.msra.mxu0 0.0
        %1036 = vmatprep.subr.mxu0 0.0
        %1037 = vmatpush1.msra.mxu0 0.0
        %1038 = vmatprep.subr.mxu0 0.0
        %1039 = vmatpush1.msra.mxu0 0.0
        %1040 = vmatprep.subr.mxu0 0.0
        %1041 = vmatpush1.msra.mxu0 0.0
        %1042 = vmatprep.subr.mxu0 0.0
        %1043 = vmatpush1.msra.mxu0 0.0
        %1044 = vmatprep.subr.mxu0 0.0
        %1045 = vmatpush1.msra.mxu0 0.0
        %1046 = vmatprep.subr.mxu0 0.0
        %1047 = vmatpush1.msra.mxu0 0.0
        %1048 = vmatprep.subr.mxu0 0.0
        %1049 = vmatpush1.msra.mxu0 0.0
        %1050 = vmatprep.subr.mxu0 0.0
        %1051 = vmatpush1.msra.mxu0 0.0
        %1052 = vmatprep.subr.mxu0 0.0
        %1053 = vmatpush1.msra.mxu0 0.0
        %1054 = vmatprep.subr.mxu0 0.0
        %1055 = vmatpush1.msra.mxu0 0.0
        %1056 = vmatprep.subr.mxu0 0.0
        %1057 = vmatpush1.msra.mxu0 0.0
        %1058 = vmatprep.subr.mxu0 0.0
        %1059 = vmatpush1.msra.mxu0 0.0
        %1060 = vmatprep.subr.mxu0 0.0
        %1061 = vmatpush1.msra.mxu0 0.0
        %1062 = vmatprep.mubr.f32.mxu0 0.0
        %1063 = vmatmul.mubr.f32.gmra.mrb[0].mxu0 %v786
        %v1064 = vpop.f32.mrb[0].mxu0
        %v1065 = vadd.f32 0.0, %v1064
        %v1066 = vpop.f32.mrb[0].mxu0
        %1067 = vdwg.mxu0
        %v1068 = vld [vmem:[%s549] sm:$0xff]
        %v1069 = vld [vmem:[%s549 + $0x8] sm:$0xff]
        %v1070 = vld [vmem:[%s549 + $0x10] sm:$0xff]
        %v1071 = vld [vmem:[%s549 + $0x18] sm:$0xff]
        %v1072 = vld [vmem:[%s571] sm:$0xff]
        %vm1073 = vcmask 64512
        %v1075 = vsel %vm1073, %v855, 0
        %1077 = vmatprep.subr.mxu0 0.0
        %1078 = vmatpush1.msra.mxu0 %v1068
        %1079 = vmatprep.subr.mxu0 0.0
        %1080 = vmatpush1.msra.mxu0 0.0
        %1081 = vmatprep.subr.mxu0 0.0
        %1082 = vmatpush1.msra.mxu0 0.0
        %1083 = vmatprep.subr.mxu0 0.0
        %1084 = vmatpush1.msra.mxu0 0.0
        %1085 = vmatprep.subr.mxu0 0.0
        %1086 = vmatpush1.msra.mxu0 0.0
        %1087 = vmatprep.subr.mxu0 0.0
        %1088 = vmatpush1.msra.mxu0 0.0
        %1089 = vmatprep.subr.mxu0 0.0
        %1090 = vmatpush1.msra.mxu0 0.0
        %1091 = vmatprep.subr.mxu0 0.0
        %1092 = vmatpush1.msra.mxu0 0.0
        %1093 = vmatprep.subr.mxu0 0.0
        %1094 = vmatpush1.msra.mxu0 0.0
        %1095 = vmatprep.subr.mxu0 0.0
        %1096 = vmatpush1.msra.mxu0 0.0
        %1097 = vmatprep.subr.mxu0 0.0
        %1098 = vmatpush1.msra.mxu0 0.0
        %1099 = vmatprep.subr.mxu0 0.0
        %1100 = vmatpush1.msra.mxu0 0.0
        %1101 = vmatprep.subr.mxu0 0.0
        %1102 = vmatpush1.msra.mxu0 0.0
        %1103 = vmatprep.subr.mxu0 0.0
        %1104 = vmatpush1.msra.mxu0 0.0
        %1105 = vmatprep.subr.mxu0 0.0
        %1106 = vmatpush1.msra.mxu0 0.0
        %1107 = vmatprep.subr.mxu0 0.0
        %1108 = vmatpush1.msra.mxu0 0.0
        %1109 = vmatprep.subr.mxu0 0.0
        %1110 = vmatpush1.msra.mxu0 0.0
        %1111 = vmatprep.subr.mxu0 0.0
        %1112 = vmatpush1.msra.mxu0 0.0
        %1113 = vmatprep.subr.mxu0 0.0
        %1114 = vmatpush1.msra.mxu0 0.0
        %1115 = vmatprep.subr.mxu0 0.0
        %1116 = vmatpush1.msra.mxu0 0.0
        %1117 = vmatprep.subr.mxu0 0.0
        %1118 = vmatpush1.msra.mxu0 0.0
        %1119 = vmatprep.subr.mxu0 0.0
        %1120 = vmatpush1.msra.mxu0 0.0
        %1121 = vmatprep.subr.mxu0 0.0
        %1122 = vmatpush1.msra.mxu0 0.0
        %1123 = vmatprep.subr.mxu0 0.0
        %1124 = vmatpush1.msra.mxu0 0.0
        %1125 = vmatprep.subr.mxu0 0.0
        %1126 = vmatpush1.msra.mxu0 0.0
        %1127 = vmatprep.subr.mxu0 0.0
        %1128 = vmatpush1.msra.mxu0 0.0
        %1129 = vmatprep.subr.mxu0 0.0
        %1130 = vmatpush1.msra.mxu0 0.0
        %1131 = vmatprep.subr.mxu0 0.0
        %1132 = vmatpush1.msra.mxu0 0.0
        %1133 = vmatprep.subr.mxu0 0.0
        %1134 = vmatpush1.msra.mxu0 0.0
        %1135 = vmatprep.subr.mxu0 0.0
        %1136 = vmatpush1.msra.mxu0 0.0
        %1137 = vmatprep.subr.mxu0 0.0
        %1138 = vmatpush1.msra.mxu0 0.0
        %1139 = vmatprep.subr.mxu0 0.0
        %1140 = vmatpush1.msra.mxu0 0.0
        %1141 = vmatprep.mubr.f32.mxu0 0.0
        %1142 = vmatmul.mubr.f32.gmra.mrb[0].mxu0 %v1075
        %v1143 = vpop.f32.mrb[0].mxu0
        %v1144 = vadd.f32 %v1072, %v1143
        %v1145 = vpop.f32.mrb[0].mxu0
        %1146 = vdwg.mxu0
        %v1148 = vsel %vm1073, %v925, 0
        %1150 = vmatprep.subr.mxu0 0.0
        %1151 = vmatpush1.msra.mxu0 %v1069
        %1152 = vmatprep.subr.mxu0 0.0
        %1153 = vmatpush1.msra.mxu0 0.0
        %1154 = vmatprep.subr.mxu0 0.0
        %1155 = vmatpush1.msra.mxu0 0.0
        %1156 = vmatprep.subr.mxu0 0.0
        %1157 = vmatpush1.msra.mxu0 0.0
        %1158 = vmatprep.subr.mxu0 0.0
        %1159 = vmatpush1.msra.mxu0 0.0
        %1160 = vmatprep.subr.mxu0 0.0
        %1161 = vmatpush1.msra.mxu0 0.0
        %1162 = vmatprep.subr.mxu0 0.0
        %1163 = vmatpush1.msra.mxu0 0.0
        %1164 = vmatprep.subr.mxu0 0.0
        %1165 = vmatpush1.msra.mxu0 0.0
        %1166 = vmatprep.subr.mxu0 0.0
        %1167 = vmatpush1.msra.mxu0 0.0
        %1168 = vmatprep.subr.mxu0 0.0
        %1169 = vmatpush1.msra.mxu0 0.0
        %1170 = vmatprep.subr.mxu0 0.0
        %1171 = vmatpush1.msra.mxu0 0.0
        %1172 = vmatprep.subr.mxu0 0.0
        %1173 = vmatpush1.msra.mxu0 0.0
        %1174 = vmatprep.subr.mxu0 0.0
        %1175 = vmatpush1.msra.mxu0 0.0
        %1176 = vmatprep.subr.mxu0 0.0
        %1177 = vmatpush1.msra.mxu0 0.0
        %1178 = vmatprep.subr.mxu0 0.0
        %1179 = vmatpush1.msra.mxu0 0.0
        %1180 = vmatprep.subr.mxu0 0.0
        %1181 = vmatpush1.msra.mxu0 0.0
        %1182 = vmatprep.subr.mxu0 0.0
        %1183 = vmatpush1.msra.mxu0 0.0
        %1184 = vmatprep.subr.mxu0 0.0
        %1185 = vmatpush1.msra.mxu0 0.0
        %1186 = vmatprep.subr.mxu0 0.0
        %1187 = vmatpush1.msra.mxu0 0.0
        %1188 = vmatprep.subr.mxu0 0.0
        %1189 = vmatpush1.msra.mxu0 0.0
        %1190 = vmatprep.subr.mxu0 0.0
        %1191 = vmatpush1.msra.mxu0 0.0
        %1192 = vmatprep.subr.mxu0 0.0
        %1193 = vmatpush1.msra.mxu0 0.0
        %1194 = vmatprep.subr.mxu0 0.0
        %1195 = vmatpush1.msra.mxu0 0.0
        %1196 = vmatprep.subr.mxu0 0.0
        %1197 = vmatpush1.msra.mxu0 0.0
        %1198 = vmatprep.subr.mxu0 0.0
        %1199 = vmatpush1.msra.mxu0 0.0
        %1200 = vmatprep.subr.mxu0 0.0
        %1201 = vmatpush1.msra.mxu0 0.0
        %1202 = vmatprep.subr.mxu0 0.0
        %1203 = vmatpush1.msra.mxu0 0.0
        %1204 = vmatprep.subr.mxu0 0.0
        %1205 = vmatpush1.msra.mxu0 0.0
        %1206 = vmatprep.subr.mxu0 0.0
        %1207 = vmatpush1.msra.mxu0 0.0
        %1208 = vmatprep.subr.mxu0 0.0
        %1209 = vmatpush1.msra.mxu0 0.0
        %1210 = vmatprep.subr.mxu0 0.0
        %1211 = vmatpush1.msra.mxu0 0.0
        %1212 = vmatprep.subr.mxu0 0.0
        %1213 = vmatpush1.msra.mxu0 0.0
        %1214 = vmatprep.mubr.f32.mxu0 0.0
        %1215 = vmatmul.mubr.f32.gmra.mrb[0].mxu0 %v1148
        %v1216 = vpop.f32.mrb[0].mxu0
        %v1217 = vadd.f32 %v1072, %v1216
        %v1218 = vpop.f32.mrb[0].mxu0
        %1219 = vdwg.mxu0
        %v1221 = vsel %vm1073, %v995, 0
        %1223 = vmatprep.subr.mxu0 0.0
        %1224 = vmatpush1.msra.mxu0 %v1070
        %1225 = vmatprep.subr.mxu0 0.0
        %1226 = vmatpush1.msra.mxu0 0.0
        %1227 = vmatprep.subr.mxu0 0.0
        %1228 = vmatpush1.msra.mxu0 0.0
        %1229 = vmatprep.subr.mxu0 0.0
        %1230 = vmatpush1.msra.mxu0 0.0
        %1231 = vmatprep.subr.mxu0 0.0
        %1232 = vmatpush1.msra.mxu0 0.0
        %1233 = vmatprep.subr.mxu0 0.0
        %1234 = vmatpush1.msra.mxu0 0.0
        %1235 = vmatprep.subr.mxu0 0.0
        %1236 = vmatpush1.msra.mxu0 0.0
        %1237 = vmatprep.subr.mxu0 0.0
        %1238 = vmatpush1.msra.mxu0 0.0
        %1239 = vmatprep.subr.mxu0 0.0
        %1240 = vmatpush1.msra.mxu0 0.0
        %1241 = vmatprep.subr.mxu0 0.0
        %1242 = vmatpush1.msra.mxu0 0.0
        %1243 = vmatprep.subr.mxu0 0.0
        %1244 = vmatpush1.msra.mxu0 0.0
        %1245 = vmatprep.subr.mxu0 0.0
        %1246 = vmatpush1.msra.mxu0 0.0
        %1247 = vmatprep.subr.mxu0 0.0
        %1248 = vmatpush1.msra.mxu0 0.0
        %1249 = vmatprep.subr.mxu0 0.0
        %1250 = vmatpush1.msra.mxu0 0.0
        %1251 = vmatprep.subr.mxu0 0.0
        %1252 = vmatpush1.msra.mxu0 0.0
        %1253 = vmatprep.subr.mxu0 0.0
        %1254 = vmatpush1.msra.mxu0 0.0
        %1255 = vmatprep.subr.mxu0 0.0
        %1256 = vmatpush1.msra.mxu0 0.0
        %1257 = vmatprep.subr.mxu0 0.0
        %1258 = vmatpush1.msra.mxu0 0.0
        %1259 = vmatprep.subr.mxu0 0.0
        %1260 = vmatpush1.msra.mxu0 0.0
        %1261 = vmatprep.subr.mxu0 0.0
        %1262 = vmatpush1.msra.mxu0 0.0
        %1263 = vmatprep.subr.mxu0 0.0
        %1264 = vmatpush1.msra.mxu0 0.0
        %1265 = vmatprep.subr.mxu0 0.0
        %1266 = vmatpush1.msra.mxu0 0.0
        %1267 = vmatprep.subr.mxu0 0.0
        %1268 = vmatpush1.msra.mxu0 0.0
        %1269 = vmatprep.subr.mxu0 0.0
        %1270 = vmatpush1.msra.mxu0 0.0
        %1271 = vmatprep.subr.mxu0 0.0
        %1272 = vmatpush1.msra.mxu0 0.0
        %1273 = vmatprep.subr.mxu0 0.0
        %1274 = vmatpush1.msra.mxu0 0.0
        %1275 = vmatprep.subr.mxu0 0.0
        %1276 = vmatpush1.msra.mxu0 0.0
        %1277 = vmatprep.subr.mxu0 0.0
        %1278 = vmatpush1.msra.mxu0 0.0
        %1279 = vmatprep.subr.mxu0 0.0
        %1280 = vmatpush1.msra.mxu0 0.0
        %1281 = vmatprep.subr.mxu0 0.0
        %1282 = vmatpush1.msra.mxu0 0.0
        %1283 = vmatprep.subr.mxu0 0.0
        %1284 = vmatpush1.msra.mxu0 0.0
        %1285 = vmatprep.subr.mxu0 0.0
        %1286 = vmatpush1.msra.mxu0 0.0
        %1287 = vmatprep.mubr.f32.mxu0 0.0
        %1288 = vmatmul.mubr.f32.gmra.mrb[0].mxu0 %v1221
        %v1289 = vpop.f32.mrb[0].mxu0
        %v1290 = vadd.f32 %v1072, %v1289
        %v1291 = vpop.f32.mrb[0].mxu0
        %1292 = vdwg.mxu0
        %v1294 = vsel %vm1073, %v1065, 0
        %1296 = vmatprep.subr.mxu0 0.0
        %1297 = vmatpush1.msra.mxu0 %v1071
        %1298 = vmatprep.subr.mxu0 0.0
        %1299 = vmatpush1.msra.mxu0 0.0
        %1300 = vmatprep.subr.mxu0 0.0
        %1301 = vmatpush1.msra.mxu0 0.0
        %1302 = vmatprep.subr.mxu0 0.0
        %1303 = vmatpush1.msra.mxu0 0.0
        %1304 = vmatprep.subr.mxu0 0.0
        %1305 = vmatpush1.msra.mxu0 0.0
        %1306 = vmatprep.subr.mxu0 0.0
        %1307 = vmatpush1.msra.mxu0 0.0
        %1308 = vmatprep.subr.mxu0 0.0
        %1309 = vmatpush1.msra.mxu0 0.0
        %1310 = vmatprep.subr.mxu0 0.0
        %1311 = vmatpush1.msra.mxu0 0.0
        %1312 = vmatprep.subr.mxu0 0.0
        %1313 = vmatpush1.msra.mxu0 0.0
        %1314 = vmatprep.subr.mxu0 0.0
        %1315 = vmatpush1.msra.mxu0 0.0
        %1316 = vmatprep.subr.mxu0 0.0
        %1317 = vmatpush1.msra.mxu0 0.0
        %1318 = vmatprep.subr.mxu0 0.0
        %1319 = vmatpush1.msra.mxu0 0.0
        %1320 = vmatprep.subr.mxu0 0.0
        %1321 = vmatpush1.msra.mxu0 0.0
        %1322 = vmatprep.subr.mxu0 0.0
        %1323 = vmatpush1.msra.mxu0 0.0
        %1324 = vmatprep.subr.mxu0 0.0
        %1325 = vmatpush1.msra.mxu0 0.0
        %1326 = vmatprep.subr.mxu0 0.0
        %1327 = vmatpush1.msra.mxu0 0.0
        %1328 = vmatprep.subr.mxu0 0.0
        %1329 = vmatpush1.msra.mxu0 0.0
        %1330 = vmatprep.subr.mxu0 0.0
        %1331 = vmatpush1.msra.mxu0 0.0
        %1332 = vmatprep.subr.mxu0 0.0
        %1333 = vmatpush1.msra.mxu0 0.0
        %1334 = vmatprep.subr.mxu0 0.0
        %1335 = vmatpush1.msra.mxu0 0.0
        %1336 = vmatprep.subr.mxu0 0.0
        %1337 = vmatpush1.msra.mxu0 0.0
        %1338 = vmatprep.subr.mxu0 0.0
        %1339 = vmatpush1.msra.mxu0 0.0
        %1340 = vmatprep.subr.mxu0 0.0
        %1341 = vmatpush1.msra.mxu0 0.0
        %1342 = vmatprep.subr.mxu0 0.0
        %1343 = vmatpush1.msra.mxu0 0.0
        %1344 = vmatprep.subr.mxu0 0.0
        %1345 = vmatpush1.msra.mxu0 0.0
        %1346 = vmatprep.subr.mxu0 0.0
        %1347 = vmatpush1.msra.mxu0 0.0
        %1348 = vmatprep.subr.mxu0 0.0
        %1349 = vmatpush1.msra.mxu0 0.0
        %1350 = vmatprep.subr.mxu0 0.0
        %1351 = vmatpush1.msra.mxu0 0.0
        %1352 = vmatprep.subr.mxu0 0.0
        %1353 = vmatpush1.msra.mxu0 0.0
        %1354 = vmatprep.subr.mxu0 0.0
        %1355 = vmatpush1.msra.mxu0 0.0
        %1356 = vmatprep.subr.mxu0 0.0
        %1357 = vmatpush1.msra.mxu0 0.0
        %1358 = vmatprep.subr.mxu0 0.0
        %1359 = vmatpush1.msra.mxu0 0.0
        %1360 = vmatprep.mubr.f32.mxu0 0.0
        %1361 = vmatmul.mubr.f32.gmra.mrb[0].mxu0 %v1294
        %v1362 = vpop.f32.mrb[0].mxu0
        %v1363 = vadd.f32 %v1072, %v1362
        %v1364 = vpop.f32.mrb[0].mxu0
        %1365 = vdwg.mxu0
        %1366 = vmax.xlane.f32.xlu0 %v1144
        %v1367 = vpop.xlane.xlu0 %1366
        %1368 = vmax.xlane.f32.xlu0 %v1217
        %v1369 = vpop.xlane.xlu0 %1368
        %1370 = vmax.xlane.f32.xlu0 %v1290
        %v1371 = vpop.xlane.xlu0 %1370
        %1372 = vmax.xlane.f32.xlu0 %v1363
        %v1373 = vpop.xlane.xlu0 %1372
        %v1374 = vsub.f32 %v1144, %v1367
        %v1375 = vsub.f32 %v1217, %v1369
        %v1376 = vsub.f32 %v1290, %v1371
        %v1377 = vsub.f32 %v1363, %v1373
        %v1378 = vmul.f32 %v1374, 1.442695
        %v1379 = vpow.pop %v1378
        %v1380 = vmul.f32 %v1375, 1.442695
        %v1381 = vpow.pop %v1380
        %v1382 = vmul.f32 %v1376, 1.442695
        %v1383 = vpow.pop %v1382
        %v1384 = vmul.f32 %v1377, 1.442695
        %v1385 = vpow.pop %v1384
        %1386 = vadd.xlane.f32.xlu0 %v1379
        %v1387 = vpop.xlane.xlu0 %1386
        %1388 = vadd.xlane.f32.xlu0 %v1381
        %v1389 = vpop.xlane.xlu0 %1388
        %1390 = vadd.xlane.f32.xlu0 %v1383
        %v1391 = vpop.xlane.xlu0 %1390
        %1392 = vadd.xlane.f32.xlu0 %v1385
        %v1393 = vpop.xlane.xlu0 %1392
        %v1394 = vrcp.pop %v1387
        %v1395 = vrcp.pop %v1389
        %v1396 = vrcp.pop %v1391
        %v1397 = vrcp.pop %v1393
        %v1398 = vmul.f32 %v1379, %v1394
        %v1399 = vmul.f32 %v1381, %v1395
        %v1400 = vmul.f32 %v1383, %v1396
        %v1401 = vmul.f32 %v1385, %v1397
        %v1402 = vld [vmem:[%s558] sm:$0xff]
        %v1403 = vld [vmem:[%s558 + $0x8] sm:$0xff]
        %v1404 = vld [vmem:[%s558 + $0x10] sm:$0xff]
        %v1405 = vld [vmem:[%s558 + $0x18] sm:$0xff]
        %v1406 = vld [vmem:[%s558 + $0x20] sm:$0xff]
        %v1407 = vld [vmem:[%s558 + $0x28] sm:$0xff]
        %v1408 = vld [vmem:[%s558 + $0x30] sm:$0xff]
        %v1409 = vld [vmem:[%s558 + $0x38] sm:$0xff]
        %v1410 = vld [vmem:[%s558 + $0x40] sm:$0xff]
        %v1411 = vld [vmem:[%s558 + $0x48] sm:$0xff]
        %v1412 = vld [vmem:[%s558 + $0x50] sm:$0xff]
        %v1413 = vld [vmem:[%s558 + $0x58] sm:$0xff]
        %v1414 = vld [vmem:[%s558 + $0x60] sm:$0xff]
        %v1415 = vld [vmem:[%s558 + $0x68] sm:$0xff]
        %v1416 = vld [vmem:[%s558 + $0x70] sm:$0xff]
        %v1417 = vld [vmem:[%s558 + $0x78] sm:$0xff]
        %v1418 = vld [vmem:[%s558 + $0x80] sm:$0xff]
        %v1419 = vld [vmem:[%s558 + $0x88] sm:$0xff]
        %v1420 = vld [vmem:[%s558 + $0x90] sm:$0xff]
        %v1421 = vld [vmem:[%s558 + $0x98] sm:$0xff]
        %v1422 = vld [vmem:[%s558 + $0xa0] sm:$0xff]
        %v1423 = vld [vmem:[%s558 + $0xa8] sm:$0xff]
        %v1424 = vld [vmem:[%s558 + $0xb0] sm:$0xff]
        %v1425 = vld [vmem:[%s558 + $0xb8] sm:$0xff]
        %v1426 = vld [vmem:[%s558 + $0xc0] sm:$0xff]
        %v1427 = vld [vmem:[%s558 + $0xc8] sm:$0xff]
        %v1428 = vld [vmem:[%s558 + $0xd0] sm:$0xff]
        %v1429 = vld [vmem:[%s558 + $0xd8] sm:$0xff]
        %v1430 = vld [vmem:[%s558 + $0xe0] sm:$0xff]
        %v1431 = vld [vmem:[%s558 + $0xe8] sm:$0xff]
        %v1432 = vld [vmem:[%s558 + $0xf0] sm:$0xff]
        %v1433 = vld [vmem:[%s558 + $0xf8] sm:$0xff]
        %v1434 = vld [vmem:[%s558 + $0x100] sm:$0xff]
        %v1435 = vld [vmem:[%s558 + $0x108] sm:$0xff]
        %v1436 = vld [vmem:[%s558 + $0x110] sm:$0xff]
        %v1437 = vld [vmem:[%s558 + $0x118] sm:$0xff]
        %v1438 = vld [vmem:[%s558 + $0x120] sm:$0xff]
        %v1439 = vld [vmem:[%s558 + $0x128] sm:$0xff]
        %v1440 = vld [vmem:[%s558 + $0x130] sm:$0xff]
        %v1441 = vld [vmem:[%s558 + $0x138] sm:$0xff]
        %v1442 = vld [vmem:[%s558 + $0x140] sm:$0xff]
        %v1443 = vld [vmem:[%s558 + $0x148] sm:$0xff]
        %v1444 = vld [vmem:[%s558 + $0x150] sm:$0xff]
        %v1445 = vld [vmem:[%s558 + $0x158] sm:$0xff]
        %v1446 = vld [vmem:[%s558 + $0x160] sm:$0xff]
        %v1447 = vld [vmem:[%s558 + $0x168] sm:$0xff]
        %v1448 = vld [vmem:[%s558 + $0x170] sm:$0xff]
        %v1449 = vld [vmem:[%s558 + $0x178] sm:$0xff]
        %v1450 = vld [vmem:[%s558 + $0x180] sm:$0xff]
        %v1451 = vld [vmem:[%s558 + $0x188] sm:$0xff]
        %v1452 = vld [vmem:[%s558 + $0x190] sm:$0xff]
        %v1453 = vld [vmem:[%s558 + $0x198] sm:$0xff]
        %v1454 = vld [vmem:[%s558 + $0x1a0] sm:$0xff]
        %v1455 = vld [vmem:[%s558 + $0x1a8] sm:$0xff]
        %v1456 = vld [vmem:[%s558 + $0x1b0] sm:$0xff]
        %v1457 = vld [vmem:[%s558 + $0x1b8] sm:$0xff]
        %v1458 = vld [vmem:[%s558 + $0x1c0] sm:$0xff]
        %v1459 = vld [vmem:[%s558 + $0x1c8] sm:$0xff]
        %v1460 = vld [vmem:[%s558 + $0x1d0] sm:$0xff]
        %v1461 = vld [vmem:[%s558 + $0x1d8] sm:$0xff]
        %v1462 = vld [vmem:[%s558 + $0x1e0] sm:$0xff]
        %v1463 = vld [vmem:[%s558 + $0x1e8] sm:$0xff]
        %v1464 = vld [vmem:[%s558 + $0x1f0] sm:$0xff]
        %v1465 = vld [vmem:[%s558 + $0x1f8] sm:$0xff]
        %1466 = vmatprep.subr.mxu0 0.0
        %1467 = vmatpush1.msra.mxu0 %v1402
        %1468 = vmatprep.subr.mxu0 0.0
        %1469 = vmatpush1.msra.mxu0 %v1403
        %1470 = vmatprep.subr.mxu0 0.0
        %1471 = vmatpush1.msra.mxu0 %v1404
        %1472 = vmatprep.subr.mxu0 0.0
        %1473 = vmatpush1.msra.mxu0 %v1405
        %1474 = vmatprep.subr.mxu0 0.0
        %1475 = vmatpush1.msra.mxu0 %v1406
        %1476 = vmatprep.subr.mxu0 0.0
        %1477 = vmatpush1.msra.mxu0 %v1407
        %1478 = vmatprep.subr.mxu0 0.0
        %1479 = vmatpush1.msra.mxu0 %v1408
        %1480 = vmatprep.subr.mxu0 0.0
        %1481 = vmatpush1.msra.mxu0 %v1409
        %1482 = vmatprep.subr.mxu0 0.0
        %1483 = vmatpush1.msra.mxu0 %v1410
        %1484 = vmatprep.subr.mxu0 0.0
        %1485 = vmatpush1.msra.mxu0 %v1411
        %1486 = vmatprep.subr.mxu0 0.0
        %1487 = vmatpush1.msra.mxu0 %v1412
        %1488 = vmatprep.subr.mxu0 0.0
        %1489 = vmatpush1.msra.mxu0 %v1413
        %1490 = vmatprep.subr.mxu0 0.0
        %1491 = vmatpush1.msra.mxu0 %v1414
        %1492 = vmatprep.subr.mxu0 0.0
        %1493 = vmatpush1.msra.mxu0 %v1415
        %1494 = vmatprep.subr.mxu0 0.0
        %1495 = vmatpush1.msra.mxu0 %v1416
        %1496 = vmatprep.subr.mxu0 0.0
        %1497 = vmatpush1.msra.mxu0 %v1417
        %1498 = vmatprep.subr.mxu0 0.0
        %1499 = vmatpush1.msra.mxu0 0.0
        %1500 = vmatprep.subr.mxu0 0.0
        %1501 = vmatpush1.msra.mxu0 0.0
        %1502 = vmatprep.subr.mxu0 0.0
        %1503 = vmatpush1.msra.mxu0 0.0
        %1504 = vmatprep.subr.mxu0 0.0
        %1505 = vmatpush1.msra.mxu0 0.0
        %1506 = vmatprep.subr.mxu0 0.0
        %1507 = vmatpush1.msra.mxu0 0.0
        %1508 = vmatprep.subr.mxu0 0.0
        %1509 = vmatpush1.msra.mxu0 0.0
        %1510 = vmatprep.subr.mxu0 0.0
        %1511 = vmatpush1.msra.mxu0 0.0
        %1512 = vmatprep.subr.mxu0 0.0
        %1513 = vmatpush1.msra.mxu0 0.0
        %1514 = vmatprep.subr.mxu0 0.0
        %1515 = vmatpush1.msra.mxu0 0.0
        %1516 = vmatprep.subr.mxu0 0.0
        %1517 = vmatpush1.msra.mxu0 0.0
        %1518 = vmatprep.subr.mxu0 0.0
        %1519 = vmatpush1.msra.mxu0 0.0
        %1520 = vmatprep.subr.mxu0 0.0
        %1521 = vmatpush1.msra.mxu0 0.0
        %1522 = vmatprep.subr.mxu0 0.0
        %1523 = vmatpush1.msra.mxu0 0.0
        %1524 = vmatprep.subr.mxu0 0.0
        %1525 = vmatpush1.msra.mxu0 0.0
        %1526 = vmatprep.subr.mxu0 0.0
        %1527 = vmatpush1.msra.mxu0 0.0
        %1528 = vmatprep.subr.mxu0 0.0
        %1529 = vmatpush1.msra.mxu0 0.0
        %1530 = vmatprep.mubr.f32.mxu0 0.0
        %1531 = vmatmul.mubr.f32.gmra.mrb[0].mxu0 %v1398
        %v1532 = vpop.f32.mrb[0].mxu0
        %v1533 = vadd.f32 0.0, %v1532
        %v1534 = vpop.f32.mrb[0].mxu0
        %1535 = vdwg.mxu0
        %1536 = vmatprep.subr.mxu0 0.0
        %1537 = vmatpush1.msra.mxu0 %v1418
        %1538 = vmatprep.subr.mxu0 0.0
        %1539 = vmatpush1.msra.mxu0 %v1419
        %1540 = vmatprep.subr.mxu0 0.0
        %1541 = vmatpush1.msra.mxu0 %v1420
        %1542 = vmatprep.subr.mxu0 0.0
        %1543 = vmatpush1.msra.mxu0 %v1421
        %1544 = vmatprep.subr.mxu0 0.0
        %1545 = vmatpush1.msra.mxu0 %v1422
        %1546 = vmatprep.subr.mxu0 0.0
        %1547 = vmatpush1.msra.mxu0 %v1423
        %1548 = vmatprep.subr.mxu0 0.0
        %1549 = vmatpush1.msra.mxu0 %v1424
        %1550 = vmatprep.subr.mxu0 0.0
        %1551 = vmatpush1.msra.mxu0 %v1425
        %1552 = vmatprep.subr.mxu0 0.0
        %1553 = vmatpush1.msra.mxu0 %v1426
        %1554 = vmatprep.subr.mxu0 0.0
        %1555 = vmatpush1.msra.mxu0 %v1427
        %1556 = vmatprep.subr.mxu0 0.0
        %1557 = vmatpush1.msra.mxu0 %v1428
        %1558 = vmatprep.subr.mxu0 0.0
        %1559 = vmatpush1.msra.mxu0 %v1429
        %1560 = vmatprep.subr.mxu0 0.0
        %1561 = vmatpush1.msra.mxu0 %v1430
        %1562 = vmatprep.subr.mxu0 0.0
        %1563 = vmatpush1.msra.mxu0 %v1431
        %1564 = vmatprep.subr.mxu0 0.0
        %1565 = vmatpush1.msra.mxu0 %v1432
        %1566 = vmatprep.subr.mxu0 0.0
        %1567 = vmatpush1.msra.mxu0 %v1433
        %1568 = vmatprep.subr.mxu0 0.0
        %1569 = vmatpush1.msra.mxu0 0.0
        %1570 = vmatprep.subr.mxu0 0.0
        %1571 = vmatpush1.msra.mxu0 0.0
        %1572 = vmatprep.subr.mxu0 0.0
        %1573 = vmatpush1.msra.mxu0 0.0
        %1574 = vmatprep.subr.mxu0 0.0
        %1575 = vmatpush1.msra.mxu0 0.0
        %1576 = vmatprep.subr.mxu0 0.0
        %1577 = vmatpush1.msra.mxu0 0.0
        %1578 = vmatprep.subr.mxu0 0.0
        %1579 = vmatpush1.msra.mxu0 0.0
        %1580 = vmatprep.subr.mxu0 0.0
        %1581 = vmatpush1.msra.mxu0 0.0
        %1582 = vmatprep.subr.mxu0 0.0
        %1583 = vmatpush1.msra.mxu0 0.0
        %1584 = vmatprep.subr.mxu0 0.0
        %1585 = vmatpush1.msra.mxu0 0.0
        %1586 = vmatprep.subr.mxu0 0.0
        %1587 = vmatpush1.msra.mxu0 0.0
        %1588 = vmatprep.subr.mxu0 0.0
        %1589 = vmatpush1.msra.mxu0 0.0
        %1590 = vmatprep.subr.mxu0 0.0
        %1591 = vmatpush1.msra.mxu0 0.0
        %1592 = vmatprep.subr.mxu0 0.0
        %1593 = vmatpush1.msra.mxu0 0.0
        %1594 = vmatprep.subr.mxu0 0.0
        %1595 = vmatpush1.msra.mxu0 0.0
        %1596 = vmatprep.subr.mxu0 0.0
        %1597 = vmatpush1.msra.mxu0 0.0
        %1598 = vmatprep.subr.mxu0 0.0
        %1599 = vmatpush1.msra.mxu0 0.0
        %1600 = vmatprep.mubr.f32.mxu0 0.0
        %1601 = vmatmul.mubr.f32.gmra.mrb[0].mxu0 %v1399
        %v1602 = vpop.f32.mrb[0].mxu0
        %v1603 = vadd.f32 0.0, %v1602
        %v1604 = vpop.f32.mrb[0].mxu0
        %1605 = vdwg.mxu0
        %1606 = vmatprep.subr.mxu0 0.0
        %1607 = vmatpush1.msra.mxu0 %v1434
        %1608 = vmatprep.subr.mxu0 0.0
        %1609 = vmatpush1.msra.mxu0 %v1435
        %1610 = vmatprep.subr.mxu0 0.0
        %1611 = vmatpush1.msra.mxu0 %v1436
        %1612 = vmatprep.subr.mxu0 0.0
        %1613 = vmatpush1.msra.mxu0 %v1437
        %1614 = vmatprep.subr.mxu0 0.0
        %1615 = vmatpush1.msra.mxu0 %v1438
        %1616 = vmatprep.subr.mxu0 0.0
        %1617 = vmatpush1.msra.mxu0 %v1439
        %1618 = vmatprep.subr.mxu0 0.0
        %1619 = vmatpush1.msra.mxu0 %v1440
        %1620 = vmatprep.subr.mxu0 0.0
        %1621 = vmatpush1.msra.mxu0 %v1441
        %1622 = vmatprep.subr.mxu0 0.0
        %1623 = vmatpush1.msra.mxu0 %v1442
        %1624 = vmatprep.subr.mxu0 0.0
        %1625 = vmatpush1.msra.mxu0 %v1443
        %1626 = vmatprep.subr.mxu0 0.0
        %1627 = vmatpush1.msra.mxu0 %v1444
        %1628 = vmatprep.subr.mxu0 0.0
        %1629 = vmatpush1.msra.mxu0 %v1445
        %1630 = vmatprep.subr.mxu0 0.0
        %1631 = vmatpush1.msra.mxu0 %v1446
        %1632 = vmatprep.subr.mxu0 0.0
        %1633 = vmatpush1.msra.mxu0 %v1447
        %1634 = vmatprep.subr.mxu0 0.0
        %1635 = vmatpush1.msra.mxu0 %v1448
        %1636 = vmatprep.subr.mxu0 0.0
        %1637 = vmatpush1.msra.mxu0 %v1449
        %1638 = vmatprep.subr.mxu0 0.0
        %1639 = vmatpush1.msra.mxu0 0.0
        %1640 = vmatprep.subr.mxu0 0.0
        %1641 = vmatpush1.msra.mxu0 0.0
        %1642 = vmatprep.subr.mxu0 0.0
        %1643 = vmatpush1.msra.mxu0 0.0
        %1644 = vmatprep.subr.mxu0 0.0
        %1645 = vmatpush1.msra.mxu0 0.0
        %1646 = vmatprep.subr.mxu0 0.0
        %1647 = vmatpush1.msra.mxu0 0.0
        %1648 = vmatprep.subr.mxu0 0.0
        %1649 = vmatpush1.msra.mxu0 0.0
        %1650 = vmatprep.subr.mxu0 0.0
        %1651 = vmatpush1.msra.mxu0 0.0
        %1652 = vmatprep.subr.mxu0 0.0
        %1653 = vmatpush1.msra.mxu0 0.0
        %1654 = vmatprep.subr.mxu0 0.0
        %1655 = vmatpush1.msra.mxu0 0.0
        %1656 = vmatprep.subr.mxu0 0.0
        %1657 = vmatpush1.msra.mxu0 0.0
        %1658 = vmatprep.subr.mxu0 0.0
        %1659 = vmatpush1.msra.mxu0 0.0
        %1660 = vmatprep.subr.mxu0 0.0
        %1661 = vmatpush1.msra.mxu0 0.0
        %1662 = vmatprep.subr.mxu0 0.0
        %1663 = vmatpush1.msra.mxu0 0.0
        %1664 = vmatprep.subr.mxu0 0.0
        %1665 = vmatpush1.msra.mxu0 0.0
        %1666 = vmatprep.subr.mxu0 0.0
        %1667 = vmatpush1.msra.mxu0 0.0
        %1668 = vmatprep.subr.mxu0 0.0
        %1669 = vmatpush1.msra.mxu0 0.0
        %1670 = vmatprep.mubr.f32.mxu0 0.0
        %1671 = vmatmul.mubr.f32.gmra.mrb[0].mxu0 %v1400
        %v1672 = vpop.f32.mrb[0].mxu0
        %v1673 = vadd.f32 0.0, %v1672
        %v1674 = vpop.f32.mrb[0].mxu0
        %1675 = vdwg.mxu0
        %1676 = vmatprep.subr.mxu0 0.0
        %1677 = vmatpush1.msra.mxu0 %v1450
        %1678 = vmatprep.subr.mxu0 0.0
        %1679 = vmatpush1.msra.mxu0 %v1451
        %1680 = vmatprep.subr.mxu0 0.0
        %1681 = vmatpush1.msra.mxu0 %v1452
        %1682 = vmatprep.subr.mxu0 0.0
        %1683 = vmatpush1.msra.mxu0 %v1453
        %1684 = vmatprep.subr.mxu0 0.0
        %1685 = vmatpush1.msra.mxu0 %v1454
        %1686 = vmatprep.subr.mxu0 0.0
        %1687 = vmatpush1.msra.mxu0 %v1455
        %1688 = vmatprep.subr.mxu0 0.0
        %1689 = vmatpush1.msra.mxu0 %v1456
        %1690 = vmatprep.subr.mxu0 0.0
        %1691 = vmatpush1.msra.mxu0 %v1457
        %1692 = vmatprep.subr.mxu0 0.0
        %1693 = vmatpush1.msra.mxu0 %v1458
        %1694 = vmatprep.subr.mxu0 0.0
        %1695 = vmatpush1.msra.mxu0 %v1459
        %1696 = vmatprep.subr.mxu0 0.0
        %1697 = vmatpush1.msra.mxu0 %v1460
        %1698 = vmatprep.subr.mxu0 0.0
        %1699 = vmatpush1.msra.mxu0 %v1461
        %1700 = vmatprep.subr.mxu0 0.0
        %1701 = vmatpush1.msra.mxu0 %v1462
        %1702 = vmatprep.subr.mxu0 0.0
        %1703 = vmatpush1.msra.mxu0 %v1463
        %1704 = vmatprep.subr.mxu0 0.0
        %1705 = vmatpush1.msra.mxu0 %v1464
        %1706 = vmatprep.subr.mxu0 0.0
        %1707 = vmatpush1.msra.mxu0 %v1465
        %1708 = vmatprep.subr.mxu0 0.0
        %1709 = vmatpush1.msra.mxu0 0.0
        %1710 = vmatprep.subr.mxu0 0.0
        %1711 = vmatpush1.msra.mxu0 0.0
        %1712 = vmatprep.subr.mxu0 0.0
        %1713 = vmatpush1.msra.mxu0 0.0
        %1714 = vmatprep.subr.mxu0 0.0
        %1715 = vmatpush1.msra.mxu0 0.0
        %1716 = vmatprep.subr.mxu0 0.0
        %1717 = vmatpush1.msra.mxu0 0.0
        %1718 = vmatprep.subr.mxu0 0.0
        %1719 = vmatpush1.msra.mxu0 0.0
        %1720 = vmatprep.subr.mxu0 0.0
        %1721 = vmatpush1.msra.mxu0 0.0
        %1722 = vmatprep.subr.mxu0 0.0
        %1723 = vmatpush1.msra.mxu0 0.0
        %1724 = vmatprep.subr.mxu0 0.0
        %1725 = vmatpush1.msra.mxu0 0.0
        %1726 = vmatprep.subr.mxu0 0.0
        %1727 = vmatpush1.msra.mxu0 0.0
        %1728 = vmatprep.subr.mxu0 0.0
        %1729 = vmatpush1.msra.mxu0 0.0
        %1730 = vmatprep.subr.mxu0 0.0
        %1731 = vmatpush1.msra.mxu0 0.0
        %1732 = vmatprep.subr.mxu0 0.0
        %1733 = vmatpush1.msra.mxu0 0.0
        %1734 = vmatprep.subr.mxu0 0.0
        %1735 = vmatpush1.msra.mxu0 0.0
        %1736 = vmatprep.subr.mxu0 0.0
        %1737 = vmatpush1.msra.mxu0 0.0
        %1738 = vmatprep.subr.mxu0 0.0
        %1739 = vmatpush1.msra.mxu0 0.0
        %1740 = vmatprep.mubr.f32.mxu0 0.0
        %1741 = vmatmul.mubr.f32.gmra.mrb[0].mxu0 %v1401
        %v1742 = vpop.f32.mrb[0].mxu0
        %v1743 = vadd.f32 0.0, %v1742
        %v1744 = vpop.f32.mrb[0].mxu0
        %1745 = vdwg.mxu0
        %1746 = vst.msk [vmem:[#allocation2] sm:$0xff] %vm1073, %v1533
        %1748 = vrot.lane.b32.xlu0 %v1603, 8
        %v1749 = vpop.permute.xlu0 %1748
        %vm1751 = vcmask 130112
        %1752 = vst.msk [vmem:[#allocation2] sm:$0xff] %vm1751, %v1749
        %1754 = vrot.lane.b32.xlu0 %v1673, 16
        %v1755 = vpop.permute.xlu0 %1754
        %vm1757 = vcmask 195712
        %1758 = vst.msk [vmem:[#allocation2] sm:$0xff] %vm1757, %v1755
        %1760 = vrot.lane.b32.xlu0 %v1743, 24
        %v1761 = vpop.permute.xlu0 %1760
        %vm1763 = vcmask 261312
        %1764 = vst.msk [vmem:[#allocation2] sm:$0xff] %vm1763, %v1761
        %v1765 = vld [vmem:[#allocation2] sm:$0xff]
        %v1766 = vld [vmem:[%s587] sm:$0xff]
        %v1767 = vld [vmem:[%s587 + $0x8] sm:$0xff]
        %v1768 = vld [vmem:[%s587 + $0x10] sm:$0xff]
        %v1769 = vld [vmem:[%s587 + $0x18] sm:$0xff]
        %v1770 = vld [vmem:[%s590] sm:$0x1]
        %v1772 = vlaneseq
        %v1773 = vshrl.u32 %v1772, 7
        %v1774 = vsub.s32 0, %v1773
        %v1775 = vrot.slane %v1770, %v1774
        %v1778 = vsel %vm730, %v1765, 0
        %1780 = vmatprep.subr.mxu0 0.0
        %1781 = vmatpush1.msra.mxu0 %v1766
        %1782 = vmatprep.subr.mxu0 0.0
        %1783 = vmatpush1.msra.mxu0 %v1767
        %1784 = vmatprep.subr.mxu0 0.0
        %1785 = vmatpush1.msra.mxu0 %v1768
        %1786 = vmatprep.subr.mxu0 0.0
        %1787 = vmatpush1.msra.mxu0 %v1769
        %1788 = vmatprep.subr.mxu0 0.0
        %1789 = vmatpush1.msra.mxu0 0.0
        %1790 = vmatprep.subr.mxu0 0.0
        %1791 = vmatpush1.msra.mxu0 0.0
        %1792 = vmatprep.subr.mxu0 0.0
        %1793 = vmatpush1.msra.mxu0 0.0
        %1794 = vmatprep.subr.mxu0 0.0
        %1795 = vmatpush1.msra.mxu0 0.0
        %1796 = vmatprep.subr.mxu0 0.0
        %1797 = vmatpush1.msra.mxu0 0.0
        %1798 = vmatprep.subr.mxu0 0.0
        %1799 = vmatpush1.msra.mxu0 0.0
        %1800 = vmatprep.subr.mxu0 0.0
        %1801 = vmatpush1.msra.mxu0 0.0
        %1802 = vmatprep.subr.mxu0 0.0
        %1803 = vmatpush1.msra.mxu0 0.0
        %1804 = vmatprep.subr.mxu0 0.0
        %1805 = vmatpush1.msra.mxu0 0.0
        %1806 = vmatprep.subr.mxu0 0.0
        %1807 = vmatpush1.msra.mxu0 0.0
        %1808 = vmatprep.subr.mxu0 0.0
        %1809 = vmatpush1.msra.mxu0 0.0
        %1810 = vmatprep.subr.mxu0 0.0
        %1811 = vmatpush1.msra.mxu0 0.0
        %1812 = vmatprep.subr.mxu0 0.0
        %1813 = vmatpush1.msra.mxu0 0.0
        %1814 = vmatprep.subr.mxu0 0.0
        %1815 = vmatpush1.msra.mxu0 0.0
        %1816 = vmatprep.subr.mxu0 0.0
        %1817 = vmatpush1.msra.mxu0 0.0
        %1818 = vmatprep.subr.mxu0 0.0
        %1819 = vmatpush1.msra.mxu0 0.0
        %1820 = vmatprep.subr.mxu0 0.0
        %1821 = vmatpush1.msra.mxu0 0.0
        %1822 = vmatprep.subr.mxu0 0.0
        %1823 = vmatpush1.msra.mxu0 0.0
        %1824 = vmatprep.subr.mxu0 0.0
        %1825 = vmatpush1.msra.mxu0 0.0
        %1826 = vmatprep.subr.mxu0 0.0
        %1827 = vmatpush1.msra.mxu0 0.0
        %1828 = vmatprep.subr.mxu0 0.0
        %1829 = vmatpush1.msra.mxu0 0.0
        %1830 = vmatprep.subr.mxu0 0.0
        %1831 = vmatpush1.msra.mxu0 0.0
        %1832 = vmatprep.subr.mxu0 0.0
        %1833 = vmatpush1.msra.mxu0 0.0
        %1834 = vmatprep.subr.mxu0 0.0
        %1835 = vmatpush1.msra.mxu0 0.0
        %1836 = vmatprep.subr.mxu0 0.0
        %1837 = vmatpush1.msra.mxu0 0.0
        %1838 = vmatprep.subr.mxu0 0.0
        %1839 = vmatpush1.msra.mxu0 0.0
        %1840 = vmatprep.subr.mxu0 0.0
        %1841 = vmatpush1.msra.mxu0 0.0
        %1842 = vmatprep.subr.mxu0 0.0
        %1843 = vmatpush1.msra.mxu0 0.0
        %1844 = vmatprep.mubr.f32.mxu0 0.0
        %1845 = vmatmul.mubr.f32.gmra.mrb[0].mxu0 %v1778
        %v1846 = vpop.f32.mrb[0].mxu0
        %v1847 = vadd.f32 %v1775, %v1846
        %v1848 = vpop.f32.mrb[0].mxu0
        %1849 = vdwg.mxu0
        %v1850 = vld [vmem:[%s567] sm:$0xff]
        %v1851 = vld [vmem:[%s567 + $0x8] sm:$0xff]
        %v1852 = vld [vmem:[%s567 + $0x10] sm:$0xff]
        %v1853 = vld [vmem:[%s567 + $0x18] sm:$0xff]
        %v1855 = vsel %vm730, %v1847, 0
        %1857 = vmatprep.subr.mxu0 0.0
        %1858 = vmatpush1.msra.mxu0 %v1850
        %1859 = vmatprep.subr.mxu0 0.0
        %1860 = vmatpush1.msra.mxu0 %v1851
        %1861 = vmatprep.subr.mxu0 0.0
        %1862 = vmatpush1.msra.mxu0 %v1852
        %1863 = vmatprep.subr.mxu0 0.0
        %1864 = vmatpush1.msra.mxu0 %v1853
        %1865 = vmatprep.subr.mxu0 0.0
        %1866 = vmatpush1.msra.mxu0 0.0
        %1867 = vmatprep.subr.mxu0 0.0
        %1868 = vmatpush1.msra.mxu0 0.0
        %1869 = vmatprep.subr.mxu0 0.0
        %1870 = vmatpush1.msra.mxu0 0.0
        %1871 = vmatprep.subr.mxu0 0.0
        %1872 = vmatpush1.msra.mxu0 0.0
        %1873 = vmatprep.subr.mxu0 0.0
        %1874 = vmatpush1.msra.mxu0 0.0
        %1875 = vmatprep.subr.mxu0 0.0
        %1876 = vmatpush1.msra.mxu0 0.0
        %1877 = vmatprep.subr.mxu0 0.0
        %1878 = vmatpush1.msra.mxu0 0.0
        %1879 = vmatprep.subr.mxu0 0.0
        %1880 = vmatpush1.msra.mxu0 0.0
        %1881 = vmatprep.subr.mxu0 0.0
        %1882 = vmatpush1.msra.mxu0 0.0
        %1883 = vmatprep.subr.mxu0 0.0
        %1884 = vmatpush1.msra.mxu0 0.0
        %1885 = vmatprep.subr.mxu0 0.0
        %1886 = vmatpush1.msra.mxu0 0.0
        %1887 = vmatprep.subr.mxu0 0.0
        %1888 = vmatpush1.msra.mxu0 0.0
        %1889 = vmatprep.subr.mxu0 0.0
        %1890 = vmatpush1.msra.mxu0 0.0
        %1891 = vmatprep.subr.mxu0 0.0
        %1892 = vmatpush1.msra.mxu0 0.0
        %1893 = vmatprep.subr.mxu0 0.0
        %1894 = vmatpush1.msra.mxu0 0.0
        %1895 = vmatprep.subr.mxu0 0.0
        %1896 = vmatpush1.msra.mxu0 0.0
        %1897 = vmatprep.subr.mxu0 0.0
        %1898 = vmatpush1.msra.mxu0 0.0
        %1899 = vmatprep.subr.mxu0 0.0
        %1900 = vmatpush1.msra.mxu0 0.0
        %1901 = vmatprep.subr.mxu0 0.0
        %1902 = vmatpush1.msra.mxu0 0.0
        %1903 = vmatprep.subr.mxu0 0.0
        %1904 = vmatpush1.msra.mxu0 0.0
        %1905 = vmatprep.subr.mxu0 0.0
        %1906 = vmatpush1.msra.mxu0 0.0
        %1907 = vmatprep.subr.mxu0 0.0
        %1908 = vmatpush1.msra.mxu0 0.0
        %1909 = vmatprep.subr.mxu0 0.0
        %1910 = vmatpush1.msra.mxu0 0.0
        %1911 = vmatprep.subr.mxu0 0.0
        %1912 = vmatpush1.msra.mxu0 0.0
        %1913 = vmatprep.subr.mxu0 0.0
        %1914 = vmatpush1.msra.mxu0 0.0
        %1915 = vmatprep.subr.mxu0 0.0
        %1916 = vmatpush1.msra.mxu0 0.0
        %1917 = vmatprep.subr.mxu0 0.0
        %1918 = vmatpush1.msra.mxu0 0.0
        %1919 = vmatprep.subr.mxu0 0.0
        %1920 = vmatpush1.msra.mxu0 0.0
        %1921 = vmatprep.mubr.f32.mxu0 0.0
        %1922 = vmatmul.mubr.f32.gmra.mrb[0].mxu0 %v1855
        %v1923 = vpop.f32.mrb[0].mxu0
        %v1924 = vadd.f32 0.0, %v1923
        %v1925 = vpop.f32.mrb[0].mxu0
        %1926 = vdwg.mxu0
        %v1927 = vmul.f32 %v1924, 0.17677669
        %v1928 = vtanh.pop %v1927
        %v1929 = vmul.f32 %v1928, 10.0
        %v1930 = vld [vmem:[%s571] sm:$0xff]
        %v1931 = vadd.f32 %v1929, %v1930
        %1932 = vmax.xlane.f32.xlu0 %v1931
        %v1933 = vpop.xlane.xlu0 %1932
        %v1934 = vsub.f32 %v1931, %v1933
        %v1935 = vmul.f32 %v1934, 1.442695
        %v1936 = vpow.pop %v1935
        %1937 = vadd.xlane.f32.xlu0 %v1936
        %v1938 = vpop.xlane.xlu0 %1937
        %v1939 = vrcp.pop %v1938
        %v1940 = vmul.f32 %v1936, %v1939
        %1941 = vst [vmem:[%s532] sm:$0xff] %v1940
        %s1942 = sand.u32 %s321, 1
        %s1943 = scalar_lea.sflag [#allocation6], %s1942
        %s1944 = sand.u32 %s321, 1
        %s1945 = smul.addr %s1944, 8
        %s1946 = scalar_lea.vmem [#allocation5], %s1945
        // Predicated region
        $region61: #{tpu_custom_call.1} parent=59 // pred_check
          %p1947 = pneg %p331
        $region62: #{tpu_custom_call.1} parent=59 // pred_check_branch
          %1949 = sbr.rel (%p1947) target = $region64
        $region63: #{tpu_custom_call.1} parent=59 // pred_region
          %s1951 = ssub.s32 128, 128
          %1952 = vsyncadd %s1943, %s1951
          %s1953 = smul.addr %s35, 2
          %s1954 = sadd.s32 %s36, %s1953
          %s1955 = smul.addr %s1954, 128
          %s1956 = scalar_lea.hbm %s11, %s1955
          %s1958 = sshll.u32 %s1946, 4
          %s1959 = int_to_ptr.vmem [resolvable:$true] %s1958
          %1961 = dma.vmem_to_hbm [thread:$0]  %s1959, 128, %s1956, %s1943
        $region64: #{tpu_custom_call.1} parent=59 // pred_fallthru
          _
      $region60: #{tpu_custom_call.1} parent=5 // pred_fallthru
        _
      %p1962 = scmp.le.s32.totalorder 2, %s26
      // Predicated region
      $region65: #{tpu_custom_call.1} parent=5 // pred_check
        %p1963 = pneg %p1962
      $region66: #{tpu_custom_call.1} parent=5 // pred_check_branch
        %1965 = sbr.rel (%p1963) target = $region68
      $region67: #{tpu_custom_call.1} parent=5 // pred_region
        %s1966 = ssub.s32 %s26, 2
        // Predicated region
        $region69: #{tpu_custom_call.1} parent=67 // pred_check
          %p1967 = pneg %p337
        $region70: #{tpu_custom_call.1} parent=67 // pred_check_branch
          %1969 = sbr.rel (%p1967) target = $region72
        $region71: #{tpu_custom_call.1} parent=67 // pred_region
          %s1970 = sand.u32 %s322, 1
          %s1971 = scalar_lea.sflag [#allocation6], %s1970
          %s1972 = sand.u32 %s322, 1
          %s1973 = smul.addr %s1972, 8
          %s1974 = scalar_lea.vmem [#allocation5], %s1973
          %1975 = dma.done %s1971, 128
        $region72: #{tpu_custom_call.1} parent=67 // pred_fallthru
          _
      $region68: #{tpu_custom_call.1} parent=5 // pred_fallthru
        _
    $region6: #{tpu_custom_call.1} parent=1 // loop_footer
      %s30 = sadd.s32 1, %s26
    $region7: #{tpu_custom_call.1} parent=1 // loop_footer_branch
      %25 = sbr.rel target = $region3
    $region8: #{tpu_custom_call.1} parent=1 // loop_exit
      _
    %1976 = vsyncpa [#allocation6], 1
    %s1977 = scalar_lea.sflag [#allocation6], 1
    %1978 = vsyncpa %s1977, 1

</llo_original>
